<compile_context>
chip_gen: v7x
topology: tpu7x:2x2x1
jax: 0.10.0
libtpu: 0.0.40
codegen_flags: <defaults>
</compile_context>

<pallas_src>
import numpy as np
import jax
import jax.numpy as jnp
from jax.experimental import pallas as pl
from jax.experimental.pallas import tpu as pltpu


# ----------------------------- config ---------------------------------------
class Config:
    hidden_size = 32
    num_attention_heads = 4
    seq_length = 8
    num_prefixes = 4
    position_dim = seq_length + num_prefixes   # 12
    scale_embeddings = 2.0
    gate_scale = 10.0
    epsilon = 1e-5
    use_einsum = True


CFG = Config()
DIN = 8                       # din (multiple of head_dim)
MEMORY_INDEX = 16             # >= din and multiple of head_dim
HEAD_DIM = CFG.hidden_size // CFG.num_attention_heads   # 8
NUM_HEADS = CFG.num_attention_heads
T_TOTAL = CFG.position_dim    # prefixes + sequence tokens


# -------------------- deterministic parameter construction ------------------
def build_params():
    hd, nh = HEAD_DIM, NUM_HEADS
    H = CFG.hidden_size
    num_partitions = DIN // hd                     # 1
    mem_head_start = MEMORY_INDEX // hd            # 2
    ss = 0                                         # retain_nablay=False

    c_fc_init = np.zeros((hd, nh, nh), np.float32)
    c_proj_init = np.zeros((hd, nh, nh), np.float32)
    eye = np.eye(num_partitions, dtype=np.float32)
    c_fc_init[:, ss:ss + num_partitions, ss:ss + num_partitions] = (1.0 / CFG.scale_embeddings) * eye
    c_fc_init[:, ss:ss + num_partitions,
              mem_head_start + num_partitions:mem_head_start + 2 * num_partitions] = eye
    c_proj_init[:, ss:ss + num_partitions, ss:ss + num_partitions] = CFG.scale_embeddings * eye
    c_proj_init[:, ss:ss + num_partitions,
                mem_head_start:mem_head_start + num_partitions] = -CFG.scale_embeddings * eye

    # Expand per-head-dim head-mixing weights (hd, out_head, in_head) into a
    # full (H, H) matrix so the kernel can run a plain MXU matmul.
    # TODO(synk): Conv2D(transpose=True) exact contraction convention unavailable;
    # this block-diagonal-per-dim expansion follows the init's (out, in) indexing.
    def expand(init):
        W = np.zeros((H, H), np.float32)
        for h in range(nh):
            for g in range(nh):
                for d in range(hd):
                    W[h * hd + d, g * hd + d] = init[d, g, h]
        return W

    W_cfc = expand(c_fc_init)
    W_proj = expand(c_proj_init)

    # tanh gate weights (self.w)
    w_gate = np.zeros((1, H), np.float32)
    w_gate[0, :DIN] = CFG.gate_scale                # retain_nablay=False
    weights_tanh = np.tanh(w_gate)

    # Gates(config) weights as initialized in __init__.
    # TODO(synk): Gates class source unavailable; reconstructed as
    #   g_i = sigmoid(h @ W_i + s @ U_i + p @ V_i + b_i), out = g0*h + g1*s.
    P = CFG.position_dim
    Wg = np.zeros((H, 2), np.float32)               # w is all-zero
    Ug = np.zeros((H, 2), np.float32)               # u is all-zero
    Vg = np.zeros((P, 2), np.float32)
    Vg[CFG.seq_length:P, 0] = CFG.gate_scale
    Vg[CFG.seq_length:P, 1] = -CFG.gate_scale
    bg = np.zeros((1, 2), np.float32)
    bg[0, 1] = CFG.gate_scale

    return dict(
        W_cfc=jnp.asarray(W_cfc), W_proj=jnp.asarray(W_proj),
        weights_tanh=jnp.asarray(weights_tanh),
        Wg=jnp.asarray(Wg), Ug=jnp.asarray(Ug), Vg=jnp.asarray(Vg), bg=jnp.asarray(bg),
    )


def fuse_params(params):
    """Hoist every per-grid-step invariant out of the kernel.

    * fold the tanh-gate blends into the head-mixing matrices (exact:
        w*(X@W) + (1-w)*X == X @ (W*w + diag(1-w)) ), pre-cast them to bf16,
    * pre-normalize the LN weights so sum(w) is never recomputed in-kernel,
    * keep the Gates W/U columns as 4 rows for fused VPU multiply + lane reduce,
    * Vg / bias are consumed wrapper-side (gathered per token).
    """
    H = CFG.hidden_size
    w = params["weights_tanh"].reshape(1, H).astype(jnp.float32)      # tanh(self.w)
    omw = 1.0 - w
    inv_sum_w = 1.0 / jnp.sum(w)
    wln = jnp.concatenate([w, omw, w * inv_sum_w, w * w * inv_sum_w], axis=0)   # (4, H)
    eye_omw = jnp.diag(omw[0])
    wc = (params["W_cfc"].astype(jnp.float32) * w + eye_omw).astype(jnp.bfloat16)   # (H, H)
    wp = (params["W_proj"].astype(jnp.float32) * w + eye_omw).astype(jnp.bfloat16)  # (H, H)
    gwu = jnp.concatenate([params["Wg"].T, params["Ug"].T], axis=0).astype(jnp.float32)  # (4, H)
    vg = params["Vg"].astype(jnp.float32)                              # (P, 2)
    bg = params["bg"].reshape(2).astype(jnp.float32)                   # (2,)
    return dict(wln=wln, wc=wc, wp=wp, gwu=gwu, vg=vg, bg=bg)


# ------------------------------ Pallas kernel --------------------------------
def _make_kernel(num_prefixes, n_keys, inv_t, eps, hidden):
    H = hidden

    def kernel(x_ref, wln_ref, wc_ref, wp_ref, gwu_ref, o_ref):
        BB, Tp, _ = x_ref.shape
        R = BB * Tp

        x = x_ref[...]                                   # (BB, Tp, H+4) f32
        hs3   = x[:, :, 0:H]                             # hidden states
        idx3  = x[:, :, H:H + 1]                         # float-encoded position idx
        mask3 = x[:, :, H + 1:H + 2]                     # attention mask (key side)
        g0a3  = x[:, :, H + 2:H + 3]                     # Vg[idx,0] + b0
        g1a3  = x[:, :, H + 3:H + 4]                     # Vg[idx,1] + b1

        tok3 = jax.lax.broadcasted_iota(jnp.int32, (BB, Tp, 1), 1)
        is_prefix3 = tok3 < num_prefixes                 # prefixes come first

        # ---- fused LinearBackward / LinearDescent stand-in -----------------
        # TODO(synk): LinearBackward / LinearDescent source unavailable; kept the
        # position-similarity linear-attention stand-in of the previous version.
        # Computed as a static select-accumulate over key slices (no (BB,Tp,Tp)
        # similarity matrix, no tiny batched MXU matmuls).  Padded keys have
        # hs == 0, so looping only over the real tokens is exact.
        acc = jnp.zeros((BB, Tp, H), jnp.float32)
        for j in range(n_keys):
            eq = (idx3 == idx3[:, j:j + 1, :]).astype(jnp.float32)       # (BB,Tp,1)
            # prefix (descent) query rows mask their keys; backward rows don't.
            wj = jnp.where(is_prefix3, mask3[:, j:j + 1, :], 1.0)        # (BB,Tp,1)
            acc = acc + (eq * wj) * hs3[:, j:j + 1, :]
        res3 = acc * inv_t                               # (BB, Tp, H)

        # flatten to packed 2D rows (Tp is a multiple of 8 -> layout trivial)
        res2 = res3.reshape(R, H)     # descent on prefix rows, backward grad elsewhere
        hs2 = hs3.reshape(R, H)

        # ---- c_fc with the tanh-gate blend folded into the bf16 weights ----
        first = jnp.dot(res2.astype(jnp.bfloat16), wc_ref[...],
                        preferred_element_type=jnp.float32)

        # ---- weighted layer norm (exact torch semantics, rsqrt form) -------
        wln = wln_ref[...]
        w = wln[0:1]                    # tanh(self.w)
        omw = wln[1:2]                  # 1 - w
        w_mean = wln[2:3]               # w / sum(w)
        w2_var = wln[3:4]               # w^2 / sum(w)
        mean = jnp.sum(first * w_mean, axis=-1, keepdims=True)
        diff = first - mean
        inv_std = jax.lax.rsqrt(eps + jnp.sum(w2_var * diff * diff, axis=-1, keepdims=True))
        norm = w * (diff * inv_std) + omw * first

        # ---- proj_fc with folded blend (bf16 MXU operands) ------------------
        second = jnp.dot(norm.astype(jnp.bfloat16), wp_ref[...],
                         preferred_element_type=jnp.float32)

        # ---- normalization Gates: ONE fused lane-reduce per gate ------------
        gwu = gwu_ref[...]              # rows: [Wg0, Wg1, Ug0, Ug1]
        pre0 = (jnp.sum(hs2 * gwu[0:1] + second * gwu[2:3], axis=-1, keepdims=True)
                + g0a3.reshape(R, 1))
        pre1 = (jnp.sum(hs2 * gwu[1:2] + second * gwu[3:4], axis=-1, keepdims=True)
                + g1a3.reshape(R, 1))
        backward_out = jax.nn.sigmoid(pre0) * hs2 + jax.nn.sigmoid(pre1) * second

        # ---- concat([descent[:, :num_prefixes], backward[:, num_prefixes:]]) ----
        tok2 = tok3.reshape(R, 1)
        out = jnp.where(tok2 < num_prefixes, res2, backward_out)
        o_ref[...] = out.astype(o_ref.dtype)

    return kernel


def layernorm_descent_backward(hidden_states, position_states, attention_mask,
                               params, block_b=128):
    B, T, H = hidden_states.shape
    P = position_states.shape[-1]
    fp = fuse_params(params)

    # int32 position indices instead of the one-hot (B, T, P) input.
    # TODO(synk): assumes position_states rows are one-hot (true for TinT);
    # the linear-attention stand-in only needs the argmax index.
    idx = jnp.argmax(position_states, axis=-1).astype(jnp.int32)       # (B, T)
    hs = hidden_states.astype(jnp.float32)
    mask = attention_mask.astype(jnp.float32)

    # pad tokens to a sublane multiple so in-kernel flattens are layout-trivial
    Tp = int(pl.cdiv(T, 8)) * 8
    if Tp != T:
        hs = jnp.pad(hs, ((0, 0), (0, Tp - T), (0, 0)))
        mask = jnp.pad(mask, ((0, 0), (0, Tp - T)))
        idx = jnp.pad(idx, ((0, 0), (0, Tp - T)), constant_values=P)   # sentinel: never matches

    # batch block: keep grid >= 2 whenever B >= 2 (both v7x TensorCores + pipelining)
    BB = int(max(1, min(block_b, B // 2)))
    Bp = int(pl.cdiv(B, BB)) * BB
    if Bp != B:
        hs = jnp.pad(hs, ((0, Bp - B), (0, 0), (0, 0)))
        mask = jnp.pad(mask, ((0, Bp - B), (0, 0)))
        idx = jnp.pad(idx, ((0, Bp - B), (0, 0)), constant_values=P)

    # Gates positional terms gathered in the wrapper: Vg[idx] + bias.
    vgq = fp["vg"][jnp.clip(idx, 0, P - 1)]                            # (Bp, Tp, 2)
    g0a = vgq[..., 0] + fp["bg"][0]
    g1a = vgq[..., 1] + fp["bg"][1]

    # Pack idx / mask / gate terms as 4 extra channels of the hidden-state block.
    # They live inside the lane padding of the (.., H) tile, so the per-step input
    # is a single contiguous DMA and no lane-padded (..,1) block is ever created.
    x = jnp.concatenate(
        [hs, idx.astype(jnp.float32)[..., None], mask[..., None],
         g0a[..., None], g1a[..., None]], axis=-1)                     # (Bp, Tp, H+4)

    kernel = _make_kernel(CFG.num_prefixes, T, 1.0 / T, CFG.epsilon, H)

    # explicit scoped-VMEM budget from the padded working set (lanes pad to 128);
    # clamp below v7x's 64 MiB physical VMEM, above v5e's 16 MiB default.
    block_pad_bytes = BB * Tp * 128 * 4
    vmem_limit = int(min(max(32 << 20, 16 * block_pad_bytes + (2 << 20)), 48 << 20))

    const = lambda shape: pl.BlockSpec(shape, lambda g: (0, 0))
    out_flat = pl.pallas_call(
        kernel,
        out_shape=jax.ShapeDtypeStruct((Bp * Tp, H), jnp.float32),
        grid=(Bp // BB,),
        in_specs=[
            pl.BlockSpec((BB, Tp, H + 4), lambda g: (g, 0, 0)),  # hs + packed scalars
            const((4, H)),              # LN weight rows [w, 1-w, w/sum, w^2/sum]
            const((H, H)),              # c_fc   (tanh blend folded, bf16)
            const((H, H)),              # proj_fc (tanh blend folded, bf16)
            const((4, H)),              # Gates W/U columns
        ],
        out_specs=pl.BlockSpec((BB * Tp, H), lambda g: (g, 0)),
        compiler_params=pltpu.CompilerParams(
            dimension_semantics=("parallel",),
            vmem_limit_bytes=vmem_limit),
    )(x, fp["wln"], fp["wc"], fp["wp"], fp["gwu"])

    return out_flat.reshape(Bp, Tp, H)[:B, :T]


# --------------------------------- demo --------------------------------------
if __name__ == "__main__":
    key = jax.random.PRNGKey(0)
    B, T, H, P = 2, T_TOTAL, CFG.hidden_size, CFG.position_dim

    hidden_states = jax.random.normal(key, (B, T, H), dtype=jnp.float32)

    # One-hot position states: prefix tokens first (indices seq_length..P-1),
    # then regular sequence tokens (indices 0..seq_length-1).
    pos_idx = np.zeros((T,), np.int32)
    pos_idx[:CFG.num_prefixes] = CFG.seq_length + np.arange(CFG.num_prefixes)
    pos_idx[CFG.num_prefixes:] = np.arange(CFG.seq_length)
    position_states = jnp.asarray(
        np.broadcast_to(np.eye(P, dtype=np.float32)[pos_idx], (B, T, P)).copy())

    attention_mask = jnp.ones((B, T), dtype=jnp.float32)

    params = build_params()
    out = layernorm_descent_backward(hidden_states, position_states, attention_mask, params)
    jax.block_until_ready(out)
    assert out.shape == (B, T, H) and bool(jnp.all(jnp.isfinite(out)))
    print("KERNEL_OK")
</pallas_src>

<mosaic_0001>
module attributes {stable_mosaic.version = 11 : i64} {
  func.func @kernel(%arg0: i32, %arg1: memref<1x16x36xf32, #tpu.memory_space<vmem>>, %arg2: memref<4x32xf32, #tpu.memory_space<vmem>>, %arg3: memref<32x32xbf16, #tpu.memory_space<vmem>>, %arg4: memref<32x32xbf16, #tpu.memory_space<vmem>>, %arg5: memref<4x32xf32, #tpu.memory_space<vmem>>, %arg6: memref<16x32xf32, #tpu.memory_space<vmem>>) attributes {dimension_semantics = [#tpu.dimension_semantics<parallel>], iteration_bounds = array<i64: 2>, scalar_prefetch = 0 : i64, scratch_operands = 0 : i64, tpu.core_type = #tpu.core_type<tc>, window_params = [{transform_indices = @transform_0, window_bounds = array<i64: 1, 16, 36>}, {pipeline_mode = #tpu.pipeline_mode<synchronous>, transform_indices = @transform_1, window_bounds = array<i64: 4, 32>}, {pipeline_mode = #tpu.pipeline_mode<synchronous>, transform_indices = @transform_2, window_bounds = array<i64: 32, 32>}, {pipeline_mode = #tpu.pipeline_mode<synchronous>, transform_indices = @transform_3, window_bounds = array<i64: 32, 32>}, {pipeline_mode = #tpu.pipeline_mode<synchronous>, transform_indices = @transform_4, window_bounds = array<i64: 4, 32>}, {transform_indices = @transform_5, window_bounds = array<i64: 16, 32>}]} {
    %c0 = arith.constant 0 : index
    %c0_0 = arith.constant 0 : index
    %c0_1 = arith.constant 0 : index
    %0 = vector.load %arg1[%c0, %c0_0, %c0_1] : memref<1x16x36xf32, #tpu.memory_space<vmem>>, vector<1x16x36xf32>
    %1 = vector.extract_strided_slice %0 {offsets = [0, 0, 0], sizes = [1, 16, 32], strides = [1, 1, 1]} : vector<1x16x36xf32> to vector<1x16x32xf32>
    %2 = vector.extract_strided_slice %0 {offsets = [0, 0, 32], sizes = [1, 16, 1], strides = [1, 1, 1]} : vector<1x16x36xf32> to vector<1x16x1xf32>
    %3 = vector.extract_strided_slice %0 {offsets = [0, 0, 33], sizes = [1, 16, 1], strides = [1, 1, 1]} : vector<1x16x36xf32> to vector<1x16x1xf32>
    %4 = vector.extract_strided_slice %0 {offsets = [0, 0, 34], sizes = [1, 16, 1], strides = [1, 1, 1]} : vector<1x16x36xf32> to vector<1x16x1xf32>
    %5 = vector.extract_strided_slice %0 {offsets = [0, 0, 35], sizes = [1, 16, 1], strides = [1, 1, 1]} : vector<1x16x36xf32> to vector<1x16x1xf32>
    %6 = tpu.iota {dimensions = array<i32: 1>} : vector<1x16x1xi32>
    %c4_i32 = arith.constant 4 : i32
    %7 = vector.broadcast %c4_i32 : i32 to vector<1x16x1xi32>
    %8 = arith.cmpi slt, %6, %7 : vector<1x16x1xi32>
    %cst = arith.constant 0.000000e+00 : f32
    %9 = vector.broadcast %cst : f32 to vector<1x16x32xf32>
    %10 = vector.extract_strided_slice %2 {offsets = [0, 0, 0], sizes = [1, 1, 1], strides = [1, 1, 1]} : vector<1x16x1xf32> to vector<1x1x1xf32>
    %11 = vector.broadcast %10 : vector<1x1x1xf32> to vector<1x16x1xf32>
    %12 = arith.cmpf oeq, %2, %11 : vector<1x16x1xf32>
    %13 = arith.extui %12 : vector<1x16x1xi1> to vector<1x16x1xi32>
    %14 = arith.sitofp %13 : vector<1x16x1xi32> to vector<1x16x1xf32>
    %15 = vector.extract_strided_slice %3 {offsets = [0, 0, 0], sizes = [1, 1, 1], strides = [1, 1, 1]} : vector<1x16x1xf32> to vector<1x1x1xf32>
    %cst_2 = arith.constant 1.000000e+00 : f32
    %16 = vector.shape_cast %15 : vector<1x1x1xf32> to vector<1x1x1xf32>
    %17 = vector.broadcast %16 : vector<1x1x1xf32> to vector<1x16x1xf32>
    %18 = vector.broadcast %cst_2 : f32 to vector<1x16x1xf32>
    %19 = arith.select %8, %17, %18 : vector<1x16x1xi1>, vector<1x16x1xf32>
    %20 = arith.mulf %14, %19 : vector<1x16x1xf32>
    %21 = vector.extract_strided_slice %1 {offsets = [0, 0, 0], sizes = [1, 1, 32], strides = [1, 1, 1]} : vector<1x16x32xf32> to vector<1x1x32xf32>
    %22 = vector.broadcast %20 : vector<1x16x1xf32> to vector<1x16x32xf32>
    %23 = vector.broadcast %21 : vector<1x1x32xf32> to vector<1x16x32xf32>
    %24 = arith.mulf %22, %23 : vector<1x16x32xf32>
    %25 = arith.addf %9, %24 : vector<1x16x32xf32>
    %26 = vector.extract_strided_slice %2 {offsets = [0, 1, 0], sizes = [1, 1, 1], strides = [1, 1, 1]} : vector<1x16x1xf32> to vector<1x1x1xf32>
    %27 = vector.broadcast %26 : vector<1x1x1xf32> to vector<1x16x1xf32>
    %28 = arith.cmpf oeq, %2, %27 : vector<1x16x1xf32>
    %29 = arith.extui %28 : vector<1x16x1xi1> to vector<1x16x1xi32>
    %30 = arith.sitofp %29 : vector<1x16x1xi32> to vector<1x16x1xf32>
    %31 = vector.extract_strided_slice %3 {offsets = [0, 1, 0], sizes = [1, 1, 1], strides = [1, 1, 1]} : vector<1x16x1xf32> to vector<1x1x1xf32>
    %cst_3 = arith.constant 1.000000e+00 : f32
    %32 = vector.shape_cast %31 : vector<1x1x1xf32> to vector<1x1x1xf32>
    %33 = vector.broadcast %32 : vector<1x1x1xf32> to vector<1x16x1xf32>
    %34 = vector.broadcast %cst_3 : f32 to vector<1x16x1xf32>
    %35 = arith.select %8, %33, %34 : vector<1x16x1xi1>, vector<1x16x1xf32>
    %36 = arith.mulf %30, %35 : vector<1x16x1xf32>
    %37 = vector.extract_strided_slice %1 {offsets = [0, 1, 0], sizes = [1, 1, 32], strides = [1, 1, 1]} : vector<1x16x32xf32> to vector<1x1x32xf32>
    %38 = vector.broadcast %36 : vector<1x16x1xf32> to vector<1x16x32xf32>
    %39 = vector.broadcast %37 : vector<1x1x32xf32> to vector<1x16x32xf32>
    %40 = arith.mulf %38, %39 : vector<1x16x32xf32>
    %41 = arith.addf %25, %40 : vector<1x16x32xf32>
    %42 = vector.extract_strided_slice %2 {offsets = [0, 2, 0], sizes = [1, 1, 1], strides = [1, 1, 1]} : vector<1x16x1xf32> to vector<1x1x1xf32>
    %43 = vector.broadcast %42 : vector<1x1x1xf32> to vector<1x16x1xf32>
    %44 = arith.cmpf oeq, %2, %43 : vector<1x16x1xf32>
    %45 = arith.extui %44 : vector<1x16x1xi1> to vector<1x16x1xi32>
    %46 = arith.sitofp %45 : vector<1x16x1xi32> to vector<1x16x1xf32>
    %47 = vector.extract_strided_slice %3 {offsets = [0, 2, 0], sizes = [1, 1, 1], strides = [1, 1, 1]} : vector<1x16x1xf32> to vector<1x1x1xf32>
    %cst_4 = arith.constant 1.000000e+00 : f32
    %48 = vector.shape_cast %47 : vector<1x1x1xf32> to vector<1x1x1xf32>
    %49 = vector.broadcast %48 : vector<1x1x1xf32> to vector<1x16x1xf32>
    %50 = vector.broadcast %cst_4 : f32 to vector<1x16x1xf32>
    %51 = arith.select %8, %49, %50 : vector<1x16x1xi1>, vector<1x16x1xf32>
    %52 = arith.mulf %46, %51 : vector<1x16x1xf32>
    %53 = vector.extract_strided_slice %1 {offsets = [0, 2, 0], sizes = [1, 1, 32], strides = [1, 1, 1]} : vector<1x16x32xf32> to vector<1x1x32xf32>
    %54 = vector.broadcast %52 : vector<1x16x1xf32> to vector<1x16x32xf32>
    %55 = vector.broadcast %53 : vector<1x1x32xf32> to vector<1x16x32xf32>
    %56 = arith.mulf %54, %55 : vector<1x16x32xf32>
    %57 = arith.addf %41, %56 : vector<1x16x32xf32>
    %58 = vector.extract_strided_slice %2 {offsets = [0, 3, 0], sizes = [1, 1, 1], strides = [1, 1, 1]} : vector<1x16x1xf32> to vector<1x1x1xf32>
    %59 = vector.broadcast %58 : vector<1x1x1xf32> to vector<1x16x1xf32>
    %60 = arith.cmpf oeq, %2, %59 : vector<1x16x1xf32>
    %61 = arith.extui %60 : vector<1x16x1xi1> to vector<1x16x1xi32>
    %62 = arith.sitofp %61 : vector<1x16x1xi32> to vector<1x16x1xf32>
    %63 = vector.extract_strided_slice %3 {offsets = [0, 3, 0], sizes = [1, 1, 1], strides = [1, 1, 1]} : vector<1x16x1xf32> to vector<1x1x1xf32>
    %cst_5 = arith.constant 1.000000e+00 : f32
    %64 = vector.shape_cast %63 : vector<1x1x1xf32> to vector<1x1x1xf32>
    %65 = vector.broadcast %64 : vector<1x1x1xf32> to vector<1x16x1xf32>
    %66 = vector.broadcast %cst_5 : f32 to vector<1x16x1xf32>
    %67 = arith.select %8, %65, %66 : vector<1x16x1xi1>, vector<1x16x1xf32>
    %68 = arith.mulf %62, %67 : vector<1x16x1xf32>
    %69 = vector.extract_strided_slice %1 {offsets = [0, 3, 0], sizes = [1, 1, 32], strides = [1, 1, 1]} : vector<1x16x32xf32> to vector<1x1x32xf32>
    %70 = vector.broadcast %68 : vector<1x16x1xf32> to vector<1x16x32xf32>
    %71 = vector.broadcast %69 : vector<1x1x32xf32> to vector<1x16x32xf32>
    %72 = arith.mulf %70, %71 : vector<1x16x32xf32>
    %73 = arith.addf %57, %72 : vector<1x16x32xf32>
    %74 = vector.extract_strided_slice %2 {offsets = [0, 4, 0], sizes = [1, 1, 1], strides = [1, 1, 1]} : vector<1x16x1xf32> to vector<1x1x1xf32>
    %75 = vector.broadcast %74 : vector<1x1x1xf32> to vector<1x16x1xf32>
    %76 = arith.cmpf oeq, %2, %75 : vector<1x16x1xf32>
    %77 = arith.extui %76 : vector<1x16x1xi1> to vector<1x16x1xi32>
    %78 = arith.sitofp %77 : vector<1x16x1xi32> to vector<1x16x1xf32>
    %79 = vector.extract_strided_slice %3 {offsets = [0, 4, 0], sizes = [1, 1, 1], strides = [1, 1, 1]} : vector<1x16x1xf32> to vector<1x1x1xf32>
    %cst_6 = arith.constant 1.000000e+00 : f32
    %80 = vector.shape_cast %79 : vector<1x1x1xf32> to vector<1x1x1xf32>
    %81 = vector.broadcast %80 : vector<1x1x1xf32> to vector<1x16x1xf32>
    %82 = vector.broadcast %cst_6 : f32 to vector<1x16x1xf32>
    %83 = arith.select %8, %81, %82 : vector<1x16x1xi1>, vector<1x16x1xf32>
    %84 = arith.mulf %78, %83 : vector<1x16x1xf32>
    %85 = vector.extract_strided_slice %1 {offsets = [0, 4, 0], sizes = [1, 1, 32], strides = [1, 1, 1]} : vector<1x16x32xf32> to vector<1x1x32xf32>
    %86 = vector.broadcast %84 : vector<1x16x1xf32> to vector<1x16x32xf32>
    %87 = vector.broadcast %85 : vector<1x1x32xf32> to vector<1x16x32xf32>
    %88 = arith.mulf %86, %87 : vector<1x16x32xf32>
    %89 = arith.addf %73, %88 : vector<1x16x32xf32>
    %90 = vector.extract_strided_slice %2 {offsets = [0, 5, 0], sizes = [1, 1, 1], strides = [1, 1, 1]} : vector<1x16x1xf32> to vector<1x1x1xf32>
    %91 = vector.broadcast %90 : vector<1x1x1xf32> to vector<1x16x1xf32>
    %92 = arith.cmpf oeq, %2, %91 : vector<1x16x1xf32>
    %93 = arith.extui %92 : vector<1x16x1xi1> to vector<1x16x1xi32>
    %94 = arith.sitofp %93 : vector<1x16x1xi32> to vector<1x16x1xf32>
    %95 = vector.extract_strided_slice %3 {offsets = [0, 5, 0], sizes = [1, 1, 1], strides = [1, 1, 1]} : vector<1x16x1xf32> to vector<1x1x1xf32>
    %cst_7 = arith.constant 1.000000e+00 : f32
    %96 = vector.shape_cast %95 : vector<1x1x1xf32> to vector<1x1x1xf32>
    %97 = vector.broadcast %96 : vector<1x1x1xf32> to vector<1x16x1xf32>
    %98 = vector.broadcast %cst_7 : f32 to vector<1x16x1xf32>
    %99 = arith.select %8, %97, %98 : vector<1x16x1xi1>, vector<1x16x1xf32>
    %100 = arith.mulf %94, %99 : vector<1x16x1xf32>
    %101 = vector.extract_strided_slice %1 {offsets = [0, 5, 0], sizes = [1, 1, 32], strides = [1, 1, 1]} : vector<1x16x32xf32> to vector<1x1x32xf32>
    %102 = vector.broadcast %100 : vector<1x16x1xf32> to vector<1x16x32xf32>
    %103 = vector.broadcast %101 : vector<1x1x32xf32> to vector<1x16x32xf32>
    %104 = arith.mulf %102, %103 : vector<1x16x32xf32>
    %105 = arith.addf %89, %104 : vector<1x16x32xf32>
    %106 = vector.extract_strided_slice %2 {offsets = [0, 6, 0], sizes = [1, 1, 1], strides = [1, 1, 1]} : vector<1x16x1xf32> to vector<1x1x1xf32>
    %107 = vector.broadcast %106 : vector<1x1x1xf32> to vector<1x16x1xf32>
    %108 = arith.cmpf oeq, %2, %107 : vector<1x16x1xf32>
    %109 = arith.extui %108 : vector<1x16x1xi1> to vector<1x16x1xi32>
    %110 = arith.sitofp %109 : vector<1x16x1xi32> to vector<1x16x1xf32>
    %111 = vector.extract_strided_slice %3 {offsets = [0, 6, 0], sizes = [1, 1, 1], strides = [1, 1, 1]} : vector<1x16x1xf32> to vector<1x1x1xf32>
    %cst_8 = arith.constant 1.000000e+00 : f32
    %112 = vector.shape_cast %111 : vector<1x1x1xf32> to vector<1x1x1xf32>
    %113 = vector.broadcast %112 : vector<1x1x1xf32> to vector<1x16x1xf32>
    %114 = vector.broadcast %cst_8 : f32 to vector<1x16x1xf32>
    %115 = arith.select %8, %113, %114 : vector<1x16x1xi1>, vector<1x16x1xf32>
    %116 = arith.mulf %110, %115 : vector<1x16x1xf32>
    %117 = vector.extract_strided_slice %1 {offsets = [0, 6, 0], sizes = [1, 1, 32], strides = [1, 1, 1]} : vector<1x16x32xf32> to vector<1x1x32xf32>
    %118 = vector.broadcast %116 : vector<1x16x1xf32> to vector<1x16x32xf32>
    %119 = vector.broadcast %117 : vector<1x1x32xf32> to vector<1x16x32xf32>
    %120 = arith.mulf %118, %119 : vector<1x16x32xf32>
    %121 = arith.addf %105, %120 : vector<1x16x32xf32>
    %122 = vector.extract_strided_slice %2 {offsets = [0, 7, 0], sizes = [1, 1, 1], strides = [1, 1, 1]} : vector<1x16x1xf32> to vector<1x1x1xf32>
    %123 = vector.broadcast %122 : vector<1x1x1xf32> to vector<1x16x1xf32>
    %124 = arith.cmpf oeq, %2, %123 : vector<1x16x1xf32>
    %125 = arith.extui %124 : vector<1x16x1xi1> to vector<1x16x1xi32>
    %126 = arith.sitofp %125 : vector<1x16x1xi32> to vector<1x16x1xf32>
    %127 = vector.extract_strided_slice %3 {offsets = [0, 7, 0], sizes = [1, 1, 1], strides = [1, 1, 1]} : vector<1x16x1xf32> to vector<1x1x1xf32>
    %cst_9 = arith.constant 1.000000e+00 : f32
    %128 = vector.shape_cast %127 : vector<1x1x1xf32> to vector<1x1x1xf32>
    %129 = vector.broadcast %128 : vector<1x1x1xf32> to vector<1x16x1xf32>
    %130 = vector.broadcast %cst_9 : f32 to vector<1x16x1xf32>
    %131 = arith.select %8, %129, %130 : vector<1x16x1xi1>, vector<1x16x1xf32>
    %132 = arith.mulf %126, %131 : vector<1x16x1xf32>
    %133 = vector.extract_strided_slice %1 {offsets = [0, 7, 0], sizes = [1, 1, 32], strides = [1, 1, 1]} : vector<1x16x32xf32> to vector<1x1x32xf32>
    %134 = vector.broadcast %132 : vector<1x16x1xf32> to vector<1x16x32xf32>
    %135 = vector.broadcast %133 : vector<1x1x32xf32> to vector<1x16x32xf32>
    %136 = arith.mulf %134, %135 : vector<1x16x32xf32>
    %137 = arith.addf %121, %136 : vector<1x16x32xf32>
    %138 = vector.extract_strided_slice %2 {offsets = [0, 8, 0], sizes = [1, 1, 1], strides = [1, 1, 1]} : vector<1x16x1xf32> to vector<1x1x1xf32>
    %139 = vector.broadcast %138 : vector<1x1x1xf32> to vector<1x16x1xf32>
    %140 = arith.cmpf oeq, %2, %139 : vector<1x16x1xf32>
    %141 = arith.extui %140 : vector<1x16x1xi1> to vector<1x16x1xi32>
    %142 = arith.sitofp %141 : vector<1x16x1xi32> to vector<1x16x1xf32>
    %143 = vector.extract_strided_slice %3 {offsets = [0, 8, 0], sizes = [1, 1, 1], strides = [1, 1, 1]} : vector<1x16x1xf32> to vector<1x1x1xf32>
    %cst_10 = arith.constant 1.000000e+00 : f32
    %144 = vector.shape_cast %143 : vector<1x1x1xf32> to vector<1x1x1xf32>
    %145 = vector.broadcast %144 : vector<1x1x1xf32> to vector<1x16x1xf32>
    %146 = vector.broadcast %cst_10 : f32 to vector<1x16x1xf32>
    %147 = arith.select %8, %145, %146 : vector<1x16x1xi1>, vector<1x16x1xf32>
    %148 = arith.mulf %142, %147 : vector<1x16x1xf32>
    %149 = vector.extract_strided_slice %1 {offsets = [0, 8, 0], sizes = [1, 1, 32], strides = [1, 1, 1]} : vector<1x16x32xf32> to vector<1x1x32xf32>
    %150 = vector.broadcast %148 : vector<1x16x1xf32> to vector<1x16x32xf32>
    %151 = vector.broadcast %149 : vector<1x1x32xf32> to vector<1x16x32xf32>
    %152 = arith.mulf %150, %151 : vector<1x16x32xf32>
    %153 = arith.addf %137, %152 : vector<1x16x32xf32>
    %154 = vector.extract_strided_slice %2 {offsets = [0, 9, 0], sizes = [1, 1, 1], strides = [1, 1, 1]} : vector<1x16x1xf32> to vector<1x1x1xf32>
    %155 = vector.broadcast %154 : vector<1x1x1xf32> to vector<1x16x1xf32>
    %156 = arith.cmpf oeq, %2, %155 : vector<1x16x1xf32>
    %157 = arith.extui %156 : vector<1x16x1xi1> to vector<1x16x1xi32>
    %158 = arith.sitofp %157 : vector<1x16x1xi32> to vector<1x16x1xf32>
    %159 = vector.extract_strided_slice %3 {offsets = [0, 9, 0], sizes = [1, 1, 1], strides = [1, 1, 1]} : vector<1x16x1xf32> to vector<1x1x1xf32>
    %cst_11 = arith.constant 1.000000e+00 : f32
    %160 = vector.shape_cast %159 : vector<1x1x1xf32> to vector<1x1x1xf32>
    %161 = vector.broadcast %160 : vector<1x1x1xf32> to vector<1x16x1xf32>
    %162 = vector.broadcast %cst_11 : f32 to vector<1x16x1xf32>
    %163 = arith.select %8, %161, %162 : vector<1x16x1xi1>, vector<1x16x1xf32>
    %164 = arith.mulf %158, %163 : vector<1x16x1xf32>
    %165 = vector.extract_strided_slice %1 {offsets = [0, 9, 0], sizes = [1, 1, 32], strides = [1, 1, 1]} : vector<1x16x32xf32> to vector<1x1x32xf32>
    %166 = vector.broadcast %164 : vector<1x16x1xf32> to vector<1x16x32xf32>
    %167 = vector.broadcast %165 : vector<1x1x32xf32> to vector<1x16x32xf32>
    %168 = arith.mulf %166, %167 : vector<1x16x32xf32>
    %169 = arith.addf %153, %168 : vector<1x16x32xf32>
    %170 = vector.extract_strided_slice %2 {offsets = [0, 10, 0], sizes = [1, 1, 1], strides = [1, 1, 1]} : vector<1x16x1xf32> to vector<1x1x1xf32>
    %171 = vector.broadcast %170 : vector<1x1x1xf32> to vector<1x16x1xf32>
    %172 = arith.cmpf oeq, %2, %171 : vector<1x16x1xf32>
    %173 = arith.extui %172 : vector<1x16x1xi1> to vector<1x16x1xi32>
    %174 = arith.sitofp %173 : vector<1x16x1xi32> to vector<1x16x1xf32>
    %175 = vector.extract_strided_slice %3 {offsets = [0, 10, 0], sizes = [1, 1, 1], strides = [1, 1, 1]} : vector<1x16x1xf32> to vector<1x1x1xf32>
    %cst_12 = arith.constant 1.000000e+00 : f32
    %176 = vector.shape_cast %175 : vector<1x1x1xf32> to vector<1x1x1xf32>
    %177 = vector.broadcast %176 : vector<1x1x1xf32> to vector<1x16x1xf32>
    %178 = vector.broadcast %cst_12 : f32 to vector<1x16x1xf32>
    %179 = arith.select %8, %177, %178 : vector<1x16x1xi1>, vector<1x16x1xf32>
    %180 = arith.mulf %174, %179 : vector<1x16x1xf32>
    %181 = vector.extract_strided_slice %1 {offsets = [0, 10, 0], sizes = [1, 1, 32], strides = [1, 1, 1]} : vector<1x16x32xf32> to vector<1x1x32xf32>
    %182 = vector.broadcast %180 : vector<1x16x1xf32> to vector<1x16x32xf32>
    %183 = vector.broadcast %181 : vector<1x1x32xf32> to vector<1x16x32xf32>
    %184 = arith.mulf %182, %183 : vector<1x16x32xf32>
    %185 = arith.addf %169, %184 : vector<1x16x32xf32>
    %186 = vector.extract_strided_slice %2 {offsets = [0, 11, 0], sizes = [1, 1, 1], strides = [1, 1, 1]} : vector<1x16x1xf32> to vector<1x1x1xf32>
    %187 = vector.broadcast %186 : vector<1x1x1xf32> to vector<1x16x1xf32>
    %188 = arith.cmpf oeq, %2, %187 : vector<1x16x1xf32>
    %189 = arith.extui %188 : vector<1x16x1xi1> to vector<1x16x1xi32>
    %190 = arith.sitofp %189 : vector<1x16x1xi32> to vector<1x16x1xf32>
    %191 = vector.extract_strided_slice %3 {offsets = [0, 11, 0], sizes = [1, 1, 1], strides = [1, 1, 1]} : vector<1x16x1xf32> to vector<1x1x1xf32>
    %cst_13 = arith.constant 1.000000e+00 : f32
    %192 = vector.shape_cast %191 : vector<1x1x1xf32> to vector<1x1x1xf32>
    %193 = vector.broadcast %192 : vector<1x1x1xf32> to vector<1x16x1xf32>
    %194 = vector.broadcast %cst_13 : f32 to vector<1x16x1xf32>
    %195 = arith.select %8, %193, %194 : vector<1x16x1xi1>, vector<1x16x1xf32>
    %196 = arith.mulf %190, %195 : vector<1x16x1xf32>
    %197 = vector.extract_strided_slice %1 {offsets = [0, 11, 0], sizes = [1, 1, 32], strides = [1, 1, 1]} : vector<1x16x32xf32> to vector<1x1x32xf32>
    %198 = vector.broadcast %196 : vector<1x16x1xf32> to vector<1x16x32xf32>
    %199 = vector.broadcast %197 : vector<1x1x32xf32> to vector<1x16x32xf32>
    %200 = arith.mulf %198, %199 : vector<1x16x32xf32>
    %201 = arith.addf %185, %200 : vector<1x16x32xf32>
    %cst_14 = arith.constant 0.0833333358 : f32
    %202 = vector.broadcast %cst_14 : f32 to vector<1x16x32xf32>
    %203 = arith.mulf %201, %202 : vector<1x16x32xf32>
    %204 = vector.shape_cast %203 : vector<1x16x32xf32> to vector<16x32xf32>
    %205 = vector.shape_cast %1 : vector<1x16x32xf32> to vector<16x32xf32>
    %206 = arith.truncf %204 : vector<16x32xf32> to vector<16x32xbf16>
    %c0_15 = arith.constant 0 : index
    %c0_16 = arith.constant 0 : index
    %207 = vector.load %arg3[%c0_15, %c0_16] : memref<32x32xbf16, #tpu.memory_space<vmem>>, vector<32x32xbf16>
    %cst_17 = arith.constant dense<0.000000e+00> : vector<16x32xf32>
    %208 = tpu.matmul %206, %207, %cst_17 {dimension_numbers = #tpu.dot_dimension_numbers<[1], [0], [0], [1], [0, 0, 1, 1], [], []>} : vector<16x32xbf16>, vector<32x32xbf16>, vector<16x32xf32> -> vector<16x32xf32>
    %c0_18 = arith.constant 0 : index
    %c0_19 = arith.constant 0 : index
    %209 = vector.load %arg2[%c0_18, %c0_19] : memref<4x32xf32, #tpu.memory_space<vmem>>, vector<4x32xf32>
    %210 = vector.extract_strided_slice %209 {offsets = [0, 0], sizes = [1, 32], strides = [1, 1]} : vector<4x32xf32> to vector<1x32xf32>
    %211 = vector.extract_strided_slice %209 {offsets = [1, 0], sizes = [1, 32], strides = [1, 1]} : vector<4x32xf32> to vector<1x32xf32>
    %212 = vector.extract_strided_slice %209 {offsets = [2, 0], sizes = [1, 32], strides = [1, 1]} : vector<4x32xf32> to vector<1x32xf32>
    %213 = vector.extract_strided_slice %209 {offsets = [3, 0], sizes = [1, 32], strides = [1, 1]} : vector<4x32xf32> to vector<1x32xf32>
    %214 = vector.broadcast %212 : vector<1x32xf32> to vector<16x32xf32>
    %215 = arith.mulf %208, %214 : vector<16x32xf32>
    %cst_20 = arith.constant dense<0.000000e+00> : vector<16xf32>
    %216 = vector.multi_reduction <add>, %215, %cst_20 [1] : vector<16x32xf32> to vector<16xf32>
    %217 = vector.shape_cast %216 : vector<16xf32> to vector<16x1xf32>
    %218 = vector.broadcast %217 : vector<16x1xf32> to vector<16x32xf32>
    %219 = arith.subf %208, %218 : vector<16x32xf32>
    %220 = vector.broadcast %213 : vector<1x32xf32> to vector<16x32xf32>
    %221 = arith.mulf %220, %219 : vector<16x32xf32>
    %222 = arith.mulf %221, %219 : vector<16x32xf32>
    %cst_21 = arith.constant dense<0.000000e+00> : vector<16xf32>
    %223 = vector.multi_reduction <add>, %222, %cst_21 [1] : vector<16x32xf32> to vector<16xf32>
    %224 = vector.shape_cast %223 : vector<16xf32> to vector<16x1xf32>
    %cst_22 = arith.constant 9.99999974E-6 : f32
    %225 = vector.broadcast %cst_22 : f32 to vector<16x1xf32>
    %226 = arith.addf %225, %224 : vector<16x1xf32>
    %227 = math.rsqrt %226 : vector<16x1xf32>
    %228 = vector.broadcast %227 : vector<16x1xf32> to vector<16x32xf32>
    %229 = arith.mulf %219, %228 : vector<16x32xf32>
    %230 = vector.broadcast %210 : vector<1x32xf32> to vector<16x32xf32>
    %231 = arith.mulf %230, %229 : vector<16x32xf32>
    %232 = vector.broadcast %211 : vector<1x32xf32> to vector<16x32xf32>
    %233 = arith.mulf %232, %208 : vector<16x32xf32>
    %234 = arith.addf %231, %233 : vector<16x32xf32>
    %235 = arith.truncf %234 : vector<16x32xf32> to vector<16x32xbf16>
    %c0_23 = arith.constant 0 : index
    %c0_24 = arith.constant 0 : index
    %236 = vector.load %arg4[%c0_23, %c0_24] : memref<32x32xbf16, #tpu.memory_space<vmem>>, vector<32x32xbf16>
    %cst_25 = arith.constant dense<0.000000e+00> : vector<16x32xf32>
    %237 = tpu.matmul %235, %236, %cst_25 {dimension_numbers = #tpu.dot_dimension_numbers<[1], [0], [0], [1], [0, 0, 1, 1], [], []>} : vector<16x32xbf16>, vector<32x32xbf16>, vector<16x32xf32> -> vector<16x32xf32>
    %c0_26 = arith.constant 0 : index
    %c0_27 = arith.constant 0 : index
    %238 = vector.load %arg5[%c0_26, %c0_27] : memref<4x32xf32, #tpu.memory_space<vmem>>, vector<4x32xf32>
    %239 = vector.extract_strided_slice %238 {offsets = [0, 0], sizes = [1, 32], strides = [1, 1]} : vector<4x32xf32> to vector<1x32xf32>
    %240 = vector.broadcast %239 : vector<1x32xf32> to vector<16x32xf32>
    %241 = arith.mulf %205, %240 : vector<16x32xf32>
    %242 = vector.extract_strided_slice %238 {offsets = [2, 0], sizes = [1, 32], strides = [1, 1]} : vector<4x32xf32> to vector<1x32xf32>
    %243 = vector.broadcast %242 : vector<1x32xf32> to vector<16x32xf32>
    %244 = arith.mulf %237, %243 : vector<16x32xf32>
    %245 = arith.addf %241, %244 : vector<16x32xf32>
    %cst_28 = arith.constant dense<0.000000e+00> : vector<16xf32>
    %246 = vector.multi_reduction <add>, %245, %cst_28 [1] : vector<16x32xf32> to vector<16xf32>
    %247 = vector.shape_cast %246 : vector<16xf32> to vector<16x1xf32>
    %248 = vector.shape_cast %4 : vector<1x16x1xf32> to vector<16x1xf32>
    %249 = arith.addf %247, %248 : vector<16x1xf32>
    %250 = vector.extract_strided_slice %238 {offsets = [1, 0], sizes = [1, 32], strides = [1, 1]} : vector<4x32xf32> to vector<1x32xf32>
    %251 = vector.broadcast %250 : vector<1x32xf32> to vector<16x32xf32>
    %252 = arith.mulf %205, %251 : vector<16x32xf32>
    %253 = vector.extract_strided_slice %238 {offsets = [3, 0], sizes = [1, 32], strides = [1, 1]} : vector<4x32xf32> to vector<1x32xf32>
    %254 = vector.broadcast %253 : vector<1x32xf32> to vector<16x32xf32>
    %255 = arith.mulf %237, %254 : vector<16x32xf32>
    %256 = arith.addf %252, %255 : vector<16x32xf32>
    %cst_29 = arith.constant dense<0.000000e+00> : vector<16xf32>
    %257 = vector.multi_reduction <add>, %256, %cst_29 [1] : vector<16x32xf32> to vector<16xf32>
    %258 = vector.shape_cast %257 : vector<16xf32> to vector<16x1xf32>
    %259 = vector.shape_cast %5 : vector<1x16x1xf32> to vector<16x1xf32>
    %260 = arith.addf %258, %259 : vector<16x1xf32>
    %261 = arith.negf %249 : vector<16x1xf32>
    %262 = math.exp %261 : vector<16x1xf32>
    %cst_30 = arith.constant 1.000000e+00 : f32
    %263 = vector.broadcast %cst_30 : f32 to vector<16x1xf32>
    %264 = arith.addf %263, %262 : vector<16x1xf32>
    %265 = arith.divf %263, %264 : vector<16x1xf32>
    %266 = vector.broadcast %265 : vector<16x1xf32> to vector<16x32xf32>
    %267 = arith.mulf %266, %205 : vector<16x32xf32>
    %268 = arith.negf %260 : vector<16x1xf32>
    %269 = math.exp %268 : vector<16x1xf32>
    %cst_31 = arith.constant 1.000000e+00 : f32
    %270 = vector.broadcast %cst_31 : f32 to vector<16x1xf32>
    %271 = arith.addf %270, %269 : vector<16x1xf32>
    %272 = arith.divf %270, %271 : vector<16x1xf32>
    %273 = vector.broadcast %272 : vector<16x1xf32> to vector<16x32xf32>
    %274 = arith.mulf %273, %237 : vector<16x32xf32>
    %275 = arith.addf %267, %274 : vector<16x32xf32>
    %276 = vector.shape_cast %6 : vector<1x16x1xi32> to vector<16x1xi32>
    %c4_i32_32 = arith.constant 4 : i32
    %277 = vector.broadcast %c4_i32_32 : i32 to vector<16x1xi32>
    %278 = arith.cmpi slt, %276, %277 : vector<16x1xi32>
    %279 = vector.shape_cast %278 : vector<16x1xi1> to vector<16x1xi1>
    %280 = vector.broadcast %279 : vector<16x1xi1> to vector<16x32xi1>
    %281 = arith.select %280, %204, %275 : vector<16x32xi1>, vector<16x32xf32>
    %c0_33 = arith.constant 0 : index
    %c0_34 = arith.constant 0 : index
    %282 = vector.load %arg6[%c0_33, %c0_34] : memref<16x32xf32, #tpu.memory_space<vmem>>, vector<16x32xf32>
    tpu.vector_store %arg6[%c0_33, %c0_34], %281 {strides = array<i32>} : memref<16x32xf32, #tpu.memory_space<vmem>>, vector<16x32xf32>,
    return
  }
  func.func @transform_0(%arg0: i32) -> (i32, i32, i32) {
    %c0_i32 = arith.constant 0 : i32
    %c0_i32_0 = arith.constant 0 : i32
    %c0_i32_1 = arith.constant 0 : i32
    return %arg0, %c0_i32, %c0_i32_0 : i32, i32, i32
  }
  func.func @transform_1(%arg0: i32) -> (i32, i32) {
    %c0_i32 = arith.constant 0 : i32
    %c0_i32_0 = arith.constant 0 : i32
    %c0_i32_1 = arith.constant 0 : i32
    return %c0_i32, %c0_i32_0 : i32, i32
  }
  func.func @transform_2(%arg0: i32) -> (i32, i32) {
    %c0_i32 = arith.constant 0 : i32
    %c0_i32_0 = arith.constant 0 : i32
    %c0_i32_1 = arith.constant 0 : i32
    return %c0_i32, %c0_i32_0 : i32, i32
  }
  func.func @transform_3(%arg0: i32) -> (i32, i32) {
    %c0_i32 = arith.constant 0 : i32
    %c0_i32_0 = arith.constant 0 : i32
    %c0_i32_1 = arith.constant 0 : i32
    return %c0_i32, %c0_i32_0 : i32, i32
  }
  func.func @transform_4(%arg0: i32) -> (i32, i32) {
    %c0_i32 = arith.constant 0 : i32
    %c0_i32_0 = arith.constant 0 : i32
    %c0_i32_1 = arith.constant 0 : i32
    return %c0_i32, %c0_i32_0 : i32, i32
  }
  func.func @transform_5(%arg0: i32) -> (i32, i32) {
    %c0_i32 = arith.constant 0 : i32
    %c0_i32_0 = arith.constant 0 : i32
    return %arg0, %c0_i32 : i32, i32
  }
}

</mosaic_0001>

<llo_original>
// kernel: tpu_custom_call.1
$region0: #{tpu_custom_call.1}
  #allocation0 [shape = 'u32[]', space=smem, size = 0x4, offset = 0x4, fixed_abs, tag = 'smem constant byte address 0x4 - core index']
  #allocation1 [shape = 'u32[144,128]{1,0:T(1,128)}', space=vmem, size = 0x12000, scoped, tag = 'internal scratch']
  %s0 = inlined_call_operand.hbm [shape: f32[2,16,36], index: 0, kind: input, shape index: {}]
  %s1 = inlined_call_operand.hbm [shape: f32[4,32], index: 1, kind: input, shape index: {}]
  %s2 = inlined_call_operand.hbm [shape: bf16[32,32], index: 2, kind: input, shape index: {}]
  %s3 = inlined_call_operand.hbm [shape: bf16[32,32], index: 3, kind: input, shape index: {}]
  %s4 = inlined_call_operand.vmem [shape: f32[4,32], index: 4, kind: input, shape index: {}]
  %s5 = inlined_call_operand.hbm [shape: f32[32,32], index: 5, kind: output, shape index: {}]
  %s6 = sld [smem:[#allocation0]]
  $region69: #{tpu_custom_call.1} parent=0
    _
  %s8 = ssub.s32 1, %s6
  %s9 = scalar_select 0, %s8, %s6
  $region1: #{tpu_custom_call.1} parent=0
    #allocation2 [shape = 'u8[16384]{0}', space=vmem, size = 0x4000, scoped, tag = 'input window, operand 0']
    #allocation3 [shape = 's32[2]{0}', space=sflag, size = 0x8, scoped, tag = 'scoped memory for tpu_custom_call.1']
    #allocation4 [shape = 's32[2]{0}', space=sflag, size = 0x8, scoped, tag = 'scoped memory for tpu_custom_call.1']
    #allocation5 [shape = 'u8[2048]{0}', space=vmem, size = 0x800, scoped, tag = 'input window, operand 1, single buffered']
    #allocation6 [shape = 's32[1]{0}', space=sflag, size = 0x4, scoped, tag = 'scoped memory for tpu_custom_call.1']
    #allocation7 [shape = 'u8[8192]{0}', space=vmem, size = 0x2000, scoped, tag = 'input window, operand 2, single buffered']
    #allocation8 [shape = 'u8[8192]{0}', space=vmem, size = 0x2000, scoped, tag = 'input window, operand 3, single buffered']
    #allocation9 [shape = 's32[1]{0}', space=sflag, size = 0x4, scoped, tag = 'scoped memory for tpu_custom_call.1']
    #allocation10 [shape = 'u8[16384]{0}', space=vmem, size = 0x4000, scoped, tag = 'output window, operand 0']
    %10 = vsyncpa [#allocation3], 0
    %s11 = scalar_lea.sflag [#allocation3], 1
    %12 = vsyncpa %s11, 0
    %13 = vsyncpa [#allocation6], 0
    %14 = vsyncpa [#allocation9], 0
    %15 = vsyncpa [#allocation4], 0
    %s16 = scalar_lea.sflag [#allocation4], 1
    %17 = vsyncpa %s16, 0
    loop: start=0, step=1, limit=4
    $region2: #{tpu_custom_call.1} parent=1 // loop_pre_header
      _
    $region3: #{tpu_custom_call.1} parent=1 // loop_header
      %s19 = sphi 0, %s23
      %p20 = scmp.ge.s32.totalorder %s19, 4
      %s29 = sphi 0, %s31
      %s32 = sphi 0, %s29
      %s33 = sphi 0, %s32
      %s49 = sphi 0, %s33
      %s53 = sphi 0, %s53
      %s55 = sphi 0, %s53
      %s56 = sphi 0, %s55
      %s70 = sphi 0, %s56
      %s74 = sphi 0, %s74
      %s76 = sphi 0, %s74
      %s77 = sphi 0, %s76
      %s91 = sphi 0, %s77
      %s95 = sphi 0, %s95
      %s97 = sphi 0, %s95
      %s98 = sphi 0, %s97
      %s112 = sphi 0, %s98
      %s116 = sphi 0, %s116
      %s118 = sphi 0, %s116
      %s119 = sphi 0, %s118
      %s133 = sphi 0, %s119
      %s139 = sphi 0, %s141
      %s142 = sphi 0, %s139
      %s143 = sphi 0, %s142
      %s159 = sphi 0, %s143
    $region4: #{tpu_custom_call.1} parent=1 // loop_header_branch
      %22 = sbr.rel (%p20) target = $region8
    $region5: #{tpu_custom_call.1} parent=1 // loop_body
      %s24 = ssub.s32 %s19, 1
      %s25 = ssub.s32 %s19, 2
      %s26 = sadd.s32 %s19, 1
      %s27 = ssub.s32 %s19, %s26
      %p28 = scmp.eq.s32.totalorder %s27, 0
      %s30 = sadd.s32 %s29, 1
      %s31 = scalar_select %p28, %s29, %s30
      %p34 = pneg %p28
      %p35 = scmp.eq.s32.totalorder %s19, 1
      %p36 = por %p34, %p35
      %p37 = scmp.ne.s32.totalorder %s29, %s32
      %p38 = scmp.eq.s32.totalorder %s19, 0
      %p39 = por %p37, %p38
      %p40 = scmp.ne.s32.totalorder %s29, %s32
      %p41 = scmp.eq.s32.totalorder %s24, 1
      %p42 = por %p40, %p41
      %p43 = scmp.ne.s32.totalorder %s32, %s33
      %p44 = scmp.eq.s32.totalorder %s24, 0
      %p45 = por %p43, %p44
      %p46 = scmp.ne.s32.totalorder %s32, %s33
      %p47 = scmp.eq.s32.totalorder %s25, 1
      %p48 = por %p46, %p47
      %p50 = scmp.ne.s32.totalorder %s33, %s49
      %p51 = scmp.eq.s32.totalorder %s25, 0
      %p52 = por %p50, %p51
      %s54 = sadd.s32 %s53, 1
      %p57 = scmp.eq.s32.totalorder %s19, 1
      %p58 = scmp.ne.s32.totalorder %s53, %s55
      %p59 = scmp.eq.s32.totalorder %s19, 0
      %p60 = por %p58, %p59
      %p61 = scmp.ne.s32.totalorder %s53, %s55
      %p62 = scmp.eq.s32.totalorder %s24, 1
      %p63 = por %p61, %p62
      %p64 = scmp.ne.s32.totalorder %s55, %s56
      %p65 = scmp.eq.s32.totalorder %s24, 0
      %p66 = por %p64, %p65
      %p67 = scmp.ne.s32.totalorder %s55, %s56
      %p68 = scmp.eq.s32.totalorder %s25, 1
      %p69 = por %p67, %p68
      %p71 = scmp.ne.s32.totalorder %s56, %s70
      %p72 = scmp.eq.s32.totalorder %s25, 0
      %p73 = por %p71, %p72
      %s75 = sadd.s32 %s74, 1
      %p78 = scmp.eq.s32.totalorder %s19, 1
      %p79 = scmp.ne.s32.totalorder %s74, %s76
      %p80 = scmp.eq.s32.totalorder %s19, 0
      %p81 = por %p79, %p80
      %p82 = scmp.ne.s32.totalorder %s74, %s76
      %p83 = scmp.eq.s32.totalorder %s24, 1
      %p84 = por %p82, %p83
      %p85 = scmp.ne.s32.totalorder %s76, %s77
      %p86 = scmp.eq.s32.totalorder %s24, 0
      %p87 = por %p85, %p86
      %p88 = scmp.ne.s32.totalorder %s76, %s77
      %p89 = scmp.eq.s32.totalorder %s25, 1
      %p90 = por %p88, %p89
      %p92 = scmp.ne.s32.totalorder %s77, %s91
      %p93 = scmp.eq.s32.totalorder %s25, 0
      %p94 = por %p92, %p93
      %s96 = sadd.s32 %s95, 1
      %p99 = scmp.eq.s32.totalorder %s19, 1
      %p100 = scmp.ne.s32.totalorder %s95, %s97
      %p101 = scmp.eq.s32.totalorder %s19, 0
      %p102 = por %p100, %p101
      %p103 = scmp.ne.s32.totalorder %s95, %s97
      %p104 = scmp.eq.s32.totalorder %s24, 1
      %p105 = por %p103, %p104
      %p106 = scmp.ne.s32.totalorder %s97, %s98
      %p107 = scmp.eq.s32.totalorder %s24, 0
      %p108 = por %p106, %p107
      %p109 = scmp.ne.s32.totalorder %s97, %s98
      %p110 = scmp.eq.s32.totalorder %s25, 1
      %p111 = por %p109, %p110
      %p113 = scmp.ne.s32.totalorder %s98, %s112
      %p114 = scmp.eq.s32.totalorder %s25, 0
      %p115 = por %p113, %p114
      %s117 = sadd.s32 %s116, 1
      %p120 = scmp.eq.s32.totalorder %s19, 1
      %p121 = scmp.ne.s32.totalorder %s116, %s118
      %p122 = scmp.eq.s32.totalorder %s19, 0
      %p123 = por %p121, %p122
      %p124 = scmp.ne.s32.totalorder %s116, %s118
      %p125 = scmp.eq.s32.totalorder %s24, 1
      %p126 = por %p124, %p125
      %p127 = scmp.ne.s32.totalorder %s118, %s119
      %p128 = scmp.eq.s32.totalorder %s24, 0
      %p129 = por %p127, %p128
      %p130 = scmp.ne.s32.totalorder %s118, %s119
      %p131 = scmp.eq.s32.totalorder %s25, 1
      %p132 = por %p130, %p131
      %p134 = scmp.ne.s32.totalorder %s119, %s133
      %p135 = scmp.eq.s32.totalorder %s25, 0
      %p136 = por %p134, %p135
      %s137 = ssub.s32 %s19, %s26
      %p138 = scmp.eq.s32.totalorder %s137, 0
      %s140 = sadd.s32 %s139, 1
      %s141 = scalar_select %p138, %s139, %s140
      %p144 = pneg %p138
      %p145 = scmp.eq.s32.totalorder %s19, 1
      %p146 = por %p144, %p145
      %p147 = scmp.ne.s32.totalorder %s139, %s142
      %p148 = scmp.eq.s32.totalorder %s19, 0
      %p149 = por %p147, %p148
      %p150 = scmp.ne.s32.totalorder %s139, %s142
      %p151 = scmp.eq.s32.totalorder %s24, 1
      %p152 = por %p150, %p151
      %p153 = scmp.ne.s32.totalorder %s142, %s143
      %p154 = scmp.eq.s32.totalorder %s24, 0
      %p155 = por %p153, %p154
      %p156 = scmp.ne.s32.totalorder %s142, %s143
      %p157 = scmp.eq.s32.totalorder %s25, 1
      %p158 = por %p156, %p157
      %p160 = scmp.ne.s32.totalorder %s143, %s159
      %p161 = scmp.eq.s32.totalorder %s25, 0
      %p162 = por %p160, %p161
      %p163 = scmp.le.s32.totalorder 1, %s19
      %p164 = scmp.lt.s32.totalorder %s19, 3
      %p165 = pnand %p163, %p164
      %p166 = pneg %p165
      // Predicated region
      $region9: #{tpu_custom_call.1} parent=5 // pred_check
        _
      $region10: #{tpu_custom_call.1} parent=5 // pred_check_branch
        %168 = sbr.rel (%p165) target = $region12
      $region11: #{tpu_custom_call.1} parent=5 // pred_region
        %s169 = ssub.s32 %s19, 1
        // Predicated region
        $region13: #{tpu_custom_call.1} parent=11 // pred_check
          %p170 = pneg %p66
        $region14: #{tpu_custom_call.1} parent=11 // pred_check_branch
          %172 = sbr.rel (%p170) target = $region16
        $region15: #{tpu_custom_call.1} parent=11 // pred_region
          %s174 = ssub.s32 64, 64
          %175 = vsyncadd [#allocation6], %s174
          %s177 = sshll.u32 [#allocation5], 4
          %s178 = int_to_ptr.vmem [resolvable:$true] %s177
          %180 = dma.hbm_to_vmem [thread:$0]  %s1, 64, %s178, [#allocation6]
        $region16: #{tpu_custom_call.1} parent=11 // pred_fallthru
          _
        // Predicated region
        $region17: #{tpu_custom_call.1} parent=11 // pred_check
          %p181 = pneg %p87
        $region18: #{tpu_custom_call.1} parent=11 // pred_check_branch
          %183 = sbr.rel (%p181) target = $region20
        $region19: #{tpu_custom_call.1} parent=11 // pred_region
          %s185 = ssub.s32 256, 256
          %186 = vsyncadd [#allocation6], %s185
          %s187 = sshll.u32 [#allocation7], 4
          %s188 = int_to_ptr.vmem [resolvable:$true] %s187
          %193 = dma.hbm_to_vmem [thread:$0]  %s2, 256, %s188, [#allocation6], 64, 64, 4
        $region20: #{tpu_custom_call.1} parent=11 // pred_fallthru
          _
        // Predicated region
        $region21: #{tpu_custom_call.1} parent=11 // pred_check
          %p194 = pneg %p108
        $region22: #{tpu_custom_call.1} parent=11 // pred_check_branch
          %196 = sbr.rel (%p194) target = $region24
        $region23: #{tpu_custom_call.1} parent=11 // pred_region
          %s198 = ssub.s32 256, 256
          %199 = vsyncadd [#allocation9], %s198
          %s200 = sshll.u32 [#allocation8], 4
          %s201 = int_to_ptr.vmem [resolvable:$true] %s200
          %206 = dma.hbm_to_vmem [thread:$0]  %s3, 256, %s201, [#allocation9], 64, 64, 4
        $region24: #{tpu_custom_call.1} parent=11 // pred_fallthru
          _
        // Predicated region
        $region25: #{tpu_custom_call.1} parent=11 // pred_check
          %p207 = pneg %p129
        $region26: #{tpu_custom_call.1} parent=11 // pred_check_branch
          %209 = sbr.rel (%p207) target = $region28
        $region27: #{tpu_custom_call.1} parent=11 // pred_region
          _
        $region28: #{tpu_custom_call.1} parent=11 // pred_fallthru
          _
      $region12: #{tpu_custom_call.1} parent=5 // pred_fallthru
        _
      %p210 = scmp.lt.s32.totalorder %s19, 2
      // Predicated region
      $region29: #{tpu_custom_call.1} parent=5 // pred_check
        %p211 = pneg %p210
      $region30: #{tpu_custom_call.1} parent=5 // pred_check_branch
        %213 = sbr.rel (%p211) target = $region32
      $region31: #{tpu_custom_call.1} parent=5 // pred_region
        // Predicated region
        $region33: #{tpu_custom_call.1} parent=31 // pred_check
          %p214 = pneg %p39
        $region34: #{tpu_custom_call.1} parent=31 // pred_check_branch
          %216 = sbr.rel (%p214) target = $region36
        $region35: #{tpu_custom_call.1} parent=31 // pred_region
          %s217 = sand.u32 %s29, 1
          %s218 = scalar_lea.sflag [#allocation3], %s217
          %s219 = sand.u32 %s29, 1
          %s220 = smul.addr %s219, 16
          %s221 = scalar_lea.vmem [#allocation2], %s220
          %s223 = ssub.s32 256, 256
          %224 = vsyncadd %s218, %s223
          %s225 = smul.addr %s19, 2
          %s226 = smul.addr %s225, 128
          %s227 = scalar_lea.hbm %s0, %s226
          %s228 = sshll.u32 %s221, 4
          %s229 = int_to_ptr.vmem [resolvable:$true] %s228
          %234 = dma.hbm_to_vmem [thread:$0]  %s227, 256, %s229, %s218, 128, 128, 8
        $region36: #{tpu_custom_call.1} parent=31 // pred_fallthru
          _
      $region32: #{tpu_custom_call.1} parent=5 // pred_fallthru
        _
      %p235 = scmp.le.s32.totalorder 1, %s19
      %p236 = scmp.lt.s32.totalorder %s19, 3
      %p237 = pnand %p235, %p236
      %p238 = pneg %p237
      // Predicated region
      $region37: #{tpu_custom_call.1} parent=5 // pred_check
        _
      $region38: #{tpu_custom_call.1} parent=5 // pred_check_branch
        %240 = sbr.rel (%p237) target = $region40
      $region39: #{tpu_custom_call.1} parent=5 // pred_region
        %s241 = ssub.s32 %s19, 1
        %s242 = sand.u32 %s32, 1
        %s243 = scalar_lea.sflag [#allocation3], %s242
        %s244 = sand.u32 %s32, 1
        %s245 = smul.addr %s244, 16
        %s246 = scalar_lea.vmem [#allocation2], %s245
        // Predicated region
        $region41: #{tpu_custom_call.1} parent=39 // pred_check
          %p247 = pneg %p45
        $region42: #{tpu_custom_call.1} parent=39 // pred_check_branch
          %249 = sbr.rel (%p247) target = $region44
        $region43: #{tpu_custom_call.1} parent=39 // pred_region
          %250 = dma.done %s243, 256
        $region44: #{tpu_custom_call.1} parent=39 // pred_fallthru
          _
        // Predicated region
        $region45: #{tpu_custom_call.1} parent=39 // pred_check
          %p251 = pneg %p66
        $region46: #{tpu_custom_call.1} parent=39 // pred_check_branch
          %253 = sbr.rel (%p251) target = $region48
        $region47: #{tpu_custom_call.1} parent=39 // pred_region
          %254 = dma.done [#allocation6], 64
        $region48: #{tpu_custom_call.1} parent=39 // pred_fallthru
          _
        // Predicated region
        $region49: #{tpu_custom_call.1} parent=39 // pred_check
          %p255 = pneg %p87
        $region50: #{tpu_custom_call.1} parent=39 // pred_check_branch
          %257 = sbr.rel (%p255) target = $region52
        $region51: #{tpu_custom_call.1} parent=39 // pred_region
          %258 = dma.done [#allocation6], 256
        $region52: #{tpu_custom_call.1} parent=39 // pred_fallthru
          _
        // Predicated region
        $region53: #{tpu_custom_call.1} parent=39 // pred_check
          %p259 = pneg %p108
        $region54: #{tpu_custom_call.1} parent=39 // pred_check_branch
          %261 = sbr.rel (%p259) target = $region56
        $region55: #{tpu_custom_call.1} parent=39 // pred_region
          %262 = dma.done [#allocation9], 256
        $region56: #{tpu_custom_call.1} parent=39 // pred_fallthru
          _
        %s263 = sand.u32 %s32, 1
        %s264 = scalar_lea.sflag [#allocation3], %s263
        %s265 = sand.u32 %s32, 1
        %s266 = smul.addr %s265, 16
        %s267 = scalar_lea.vmem [#allocation2], %s266
        %p268 = pneg %p45
        %p269 = pneg %p42
        %p270 = pneg %p66
        %p271 = pneg %p63
        %p272 = pneg %p87
        %p273 = pneg %p84
        %p274 = pneg %p108
        %p275 = pneg %p105
        %p276 = pneg %p129
        %p277 = pneg %p126
        %p278 = pneg %p155
        %p279 = pneg %p152
        %s280 = sand.u32 %s142, 1
        %s281 = scalar_lea.sflag [#allocation4], %s280
        %s282 = sand.u32 %s142, 1
        %s283 = smul.addr %s282, 16
        %s284 = scalar_lea.vmem [#allocation10], %s283
        %s285 = smul.u32 2, %s24
        %v287 = vld [vmem:[%s246] sm:$0xff]
        %v288 = vld [vmem:[%s246 + $0x8] sm:$0xff]
        %v289 = vlaneseq
        %v290 = vshrl.u32 %v289, 7
        %v291 = vadd.s32 %v290, 8
        %vm292 = vcmp.lt.s32.totalorder %v290, 4
        %vm293 = vcmp.lt.s32.totalorder %v291, 4
        %v294 = vlaneseq
        %v295 = vshrl.u32 %v294, 7
        %v296 = vsub.s32 0, %v295
        %v297 = vrot.slane %v287, %v296
        %vm298 = vcmp.eq.f32.partialorder %v287, %v297
        %vm299 = vcmp.eq.f32.partialorder %v288, %v297
        %v300 = vsel %vm298, 1, 0
        %v301 = vsel %vm299, 1, 0
        %v302 = vcvt.s32.f32 %v300
        %v303 = vcvt.s32.f32 %v301
        %v304 = vsel %vm292, %v297, 1.0
        %v305 = vsel %vm293, %v297, 1.0
        %308 = vrot.lane.b32.xlu0 %v304, 127
        %v309 = vpop.permute.xlu0 %308
        %310 = vrot.lane.b32.xlu0 %v305, 127
        %v311 = vpop.permute.xlu0 %310
        %v314 = vmul.f32 %v302, %v309
        %v315 = vmul.f32 %v303, %v311
        %317 = vset.pattern.permute.xlu0 32
        %318 = vperm.xlu0 %317, %v314
        %v319 = vpop.permute.xlu0 %318
        %322 = vset.pattern.permute.xlu0 32
        %323 = vperm.xlu0 %322, %v315
        %v324 = vpop.permute.xlu0 %323
        %v326 = vmul.f32 %v319, %v297
        %v327 = vmul.f32 %v324, %v297
        %v328 = vadd.f32 %v326, 0.0
        %v329 = vadd.f32 %v327, 0.0
        %v330 = vlaneseq
        %v331 = vshrl.u32 %v330, 7
        %v332 = vsub.s32 1, %v331
        %v333 = vrot.slane %v287, %v332
        %vm334 = vcmp.eq.f32.partialorder %v287, %v333
        %vm335 = vcmp.eq.f32.partialorder %v288, %v333
        %v336 = vsel %vm334, 1, 0
        %v337 = vsel %vm335, 1, 0
        %v338 = vcvt.s32.f32 %v336
        %v339 = vcvt.s32.f32 %v337
        %v340 = vsel %vm292, %v333, 1.0
        %v341 = vsel %vm293, %v333, 1.0
        %344 = vrot.lane.b32.xlu0 %v340, 127
        %v345 = vpop.permute.xlu0 %344
        %346 = vrot.lane.b32.xlu0 %v341, 127
        %v347 = vpop.permute.xlu0 %346
        %v350 = vmul.f32 %v338, %v345
        %v351 = vmul.f32 %v339, %v347
        %353 = vset.pattern.permute.xlu0 32
        %354 = vperm.xlu0 %353, %v350
        %v355 = vpop.permute.xlu0 %354
        %358 = vset.pattern.permute.xlu0 32
        %359 = vperm.xlu0 %358, %v351
        %v360 = vpop.permute.xlu0 %359
        %v362 = vmul.f32 %v355, %v333
        %v363 = vmul.f32 %v360, %v333
        %v364 = vadd.f32 %v328, %v362
        %v365 = vadd.f32 %v329, %v363
        %v366 = vlaneseq
        %v367 = vshrl.u32 %v366, 7
        %v368 = vsub.s32 2, %v367
        %v369 = vrot.slane %v287, %v368
        %vm370 = vcmp.eq.f32.partialorder %v287, %v369
        %vm371 = vcmp.eq.f32.partialorder %v288, %v369
        %v372 = vsel %vm370, 1, 0
        %v373 = vsel %vm371, 1, 0
        %v374 = vcvt.s32.f32 %v372
        %v375 = vcvt.s32.f32 %v373
        %v376 = vsel %vm292, %v369, 1.0
        %v377 = vsel %vm293, %v369, 1.0
        %380 = vrot.lane.b32.xlu0 %v376, 127
        %v381 = vpop.permute.xlu0 %380
        %382 = vrot.lane.b32.xlu0 %v377, 127
        %v383 = vpop.permute.xlu0 %382
        %v386 = vmul.f32 %v374, %v381
        %v387 = vmul.f32 %v375, %v383
        %389 = vset.pattern.permute.xlu0 32
        %390 = vperm.xlu0 %389, %v386
        %v391 = vpop.permute.xlu0 %390
        %394 = vset.pattern.permute.xlu0 32
        %395 = vperm.xlu0 %394, %v387
        %v396 = vpop.permute.xlu0 %395
        %v398 = vmul.f32 %v391, %v369
        %v399 = vmul.f32 %v396, %v369
        %v400 = vadd.f32 %v364, %v398
        %v401 = vadd.f32 %v365, %v399
        %v402 = vlaneseq
        %v403 = vshrl.u32 %v402, 7
        %v404 = vsub.s32 3, %v403
        %v405 = vrot.slane %v287, %v404
        %vm406 = vcmp.eq.f32.partialorder %v287, %v405
        %vm407 = vcmp.eq.f32.partialorder %v288, %v405
        %v408 = vsel %vm406, 1, 0
        %v409 = vsel %vm407, 1, 0
        %v410 = vcvt.s32.f32 %v408
        %v411 = vcvt.s32.f32 %v409
        %v412 = vsel %vm292, %v405, 1.0
        %v413 = vsel %vm293, %v405, 1.0
        %416 = vrot.lane.b32.xlu0 %v412, 127
        %v417 = vpop.permute.xlu0 %416
        %418 = vrot.lane.b32.xlu0 %v413, 127
        %v419 = vpop.permute.xlu0 %418
        %v422 = vmul.f32 %v410, %v417
        %v423 = vmul.f32 %v411, %v419
        %425 = vset.pattern.permute.xlu0 32
        %426 = vperm.xlu0 %425, %v422
        %v427 = vpop.permute.xlu0 %426
        %430 = vset.pattern.permute.xlu0 32
        %431 = vperm.xlu0 %430, %v423
        %v432 = vpop.permute.xlu0 %431
        %v434 = vmul.f32 %v427, %v405
        %v435 = vmul.f32 %v432, %v405
        %v436 = vadd.f32 %v400, %v434
        %v437 = vadd.f32 %v401, %v435
        %v438 = vlaneseq
        %v439 = vshrl.u32 %v438, 7
        %v440 = vsub.s32 4, %v439
        %v441 = vrot.slane %v287, %v440
        %vm442 = vcmp.eq.f32.partialorder %v287, %v441
        %vm443 = vcmp.eq.f32.partialorder %v288, %v441
        %v444 = vsel %vm442, 1, 0
        %v445 = vsel %vm443, 1, 0
        %v446 = vcvt.s32.f32 %v444
        %v447 = vcvt.s32.f32 %v445
        %v448 = vsel %vm292, %v441, 1.0
        %v449 = vsel %vm293, %v441, 1.0
        %452 = vrot.lane.b32.xlu0 %v448, 127
        %v453 = vpop.permute.xlu0 %452
        %454 = vrot.lane.b32.xlu0 %v449, 127
        %v455 = vpop.permute.xlu0 %454
        %v458 = vmul.f32 %v446, %v453
        %v459 = vmul.f32 %v447, %v455
        %461 = vset.pattern.permute.xlu0 32
        %462 = vperm.xlu0 %461, %v458
        %v463 = vpop.permute.xlu0 %462
        %466 = vset.pattern.permute.xlu0 32
        %467 = vperm.xlu0 %466, %v459
        %v468 = vpop.permute.xlu0 %467
        %v470 = vmul.f32 %v463, %v441
        %v471 = vmul.f32 %v468, %v441
        %v472 = vadd.f32 %v436, %v470
        %v473 = vadd.f32 %v437, %v471
        %v474 = vlaneseq
        %v475 = vshrl.u32 %v474, 7
        %v476 = vsub.s32 5, %v475
        %v477 = vrot.slane %v287, %v476
        %vm478 = vcmp.eq.f32.partialorder %v287, %v477
        %vm479 = vcmp.eq.f32.partialorder %v288, %v477
        %v480 = vsel %vm478, 1, 0
        %v481 = vsel %vm479, 1, 0
        %v482 = vcvt.s32.f32 %v480
        %v483 = vcvt.s32.f32 %v481
        %v484 = vsel %vm292, %v477, 1.0
        %v485 = vsel %vm293, %v477, 1.0
        %488 = vrot.lane.b32.xlu0 %v484, 127
        %v489 = vpop.permute.xlu0 %488
        %490 = vrot.lane.b32.xlu0 %v485, 127
        %v491 = vpop.permute.xlu0 %490
        %v494 = vmul.f32 %v482, %v489
        %v495 = vmul.f32 %v483, %v491
        %497 = vset.pattern.permute.xlu0 32
        %498 = vperm.xlu0 %497, %v494
        %v499 = vpop.permute.xlu0 %498
        %502 = vset.pattern.permute.xlu0 32
        %503 = vperm.xlu0 %502, %v495
        %v504 = vpop.permute.xlu0 %503
        %v506 = vmul.f32 %v499, %v477
        %v507 = vmul.f32 %v504, %v477
        %v508 = vadd.f32 %v472, %v506
        %v509 = vadd.f32 %v473, %v507
        %v510 = vlaneseq
        %v511 = vshrl.u32 %v510, 7
        %v512 = vsub.s32 6, %v511
        %v513 = vrot.slane %v287, %v512
        %vm514 = vcmp.eq.f32.partialorder %v287, %v513
        %vm515 = vcmp.eq.f32.partialorder %v288, %v513
        %v516 = vsel %vm514, 1, 0
        %v517 = vsel %vm515, 1, 0
        %v518 = vcvt.s32.f32 %v516
        %v519 = vcvt.s32.f32 %v517
        %v520 = vsel %vm292, %v513, 1.0
        %v521 = vsel %vm293, %v513, 1.0
        %524 = vrot.lane.b32.xlu0 %v520, 127
        %v525 = vpop.permute.xlu0 %524
        %526 = vrot.lane.b32.xlu0 %v521, 127
        %v527 = vpop.permute.xlu0 %526
        %v530 = vmul.f32 %v518, %v525
        %v531 = vmul.f32 %v519, %v527
        %533 = vset.pattern.permute.xlu0 32
        %534 = vperm.xlu0 %533, %v530
        %v535 = vpop.permute.xlu0 %534
        %538 = vset.pattern.permute.xlu0 32
        %539 = vperm.xlu0 %538, %v531
        %v540 = vpop.permute.xlu0 %539
        %v542 = vmul.f32 %v535, %v513
        %v543 = vmul.f32 %v540, %v513
        %v544 = vadd.f32 %v508, %v542
        %v545 = vadd.f32 %v509, %v543
        %v546 = vlaneseq
        %v547 = vshrl.u32 %v546, 7
        %v548 = vsub.s32 7, %v547
        %v549 = vrot.slane %v287, %v548
        %vm550 = vcmp.eq.f32.partialorder %v287, %v549
        %vm551 = vcmp.eq.f32.partialorder %v288, %v549
        %v552 = vsel %vm550, 1, 0
        %v553 = vsel %vm551, 1, 0
        %v554 = vcvt.s32.f32 %v552
        %v555 = vcvt.s32.f32 %v553
        %v556 = vsel %vm292, %v549, 1.0
        %v557 = vsel %vm293, %v549, 1.0
        %560 = vrot.lane.b32.xlu0 %v556, 127
        %v561 = vpop.permute.xlu0 %560
        %562 = vrot.lane.b32.xlu0 %v557, 127
        %v563 = vpop.permute.xlu0 %562
        %v566 = vmul.f32 %v554, %v561
        %v567 = vmul.f32 %v555, %v563
        %569 = vset.pattern.permute.xlu0 32
        %570 = vperm.xlu0 %569, %v566
        %v571 = vpop.permute.xlu0 %570
        %574 = vset.pattern.permute.xlu0 32
        %575 = vperm.xlu0 %574, %v567
        %v576 = vpop.permute.xlu0 %575
        %v578 = vmul.f32 %v571, %v549
        %v579 = vmul.f32 %v576, %v549
        %v580 = vadd.f32 %v544, %v578
        %v581 = vadd.f32 %v545, %v579
        %v582 = vlaneseq
        %v583 = vshrl.u32 %v582, 7
        %v584 = vsub.s32 0, %v583
        %v585 = vrot.slane %v288, %v584
        %vm586 = vcmp.eq.f32.partialorder %v287, %v585
        %vm587 = vcmp.eq.f32.partialorder %v288, %v585
        %v588 = vsel %vm586, 1, 0
        %v589 = vsel %vm587, 1, 0
        %v590 = vcvt.s32.f32 %v588
        %v591 = vcvt.s32.f32 %v589
        %v592 = vsel %vm292, %v585, 1.0
        %v593 = vsel %vm293, %v585, 1.0
        %596 = vrot.lane.b32.xlu0 %v592, 127
        %v597 = vpop.permute.xlu0 %596
        %598 = vrot.lane.b32.xlu0 %v593, 127
        %v599 = vpop.permute.xlu0 %598
        %v602 = vmul.f32 %v590, %v597
        %v603 = vmul.f32 %v591, %v599
        %605 = vset.pattern.permute.xlu0 32
        %606 = vperm.xlu0 %605, %v602
        %v607 = vpop.permute.xlu0 %606
        %610 = vset.pattern.permute.xlu0 32
        %611 = vperm.xlu0 %610, %v603
        %v612 = vpop.permute.xlu0 %611
        %v614 = vmul.f32 %v607, %v585
        %v615 = vmul.f32 %v612, %v585
        %v616 = vadd.f32 %v580, %v614
        %v617 = vadd.f32 %v581, %v615
        %v618 = vlaneseq
        %v619 = vshrl.u32 %v618, 7
        %v620 = vsub.s32 1, %v619
        %v621 = vrot.slane %v288, %v620
        %vm622 = vcmp.eq.f32.partialorder %v287, %v621
        %vm623 = vcmp.eq.f32.partialorder %v288, %v621
        %v624 = vsel %vm622, 1, 0
        %v625 = vsel %vm623, 1, 0
        %v626 = vcvt.s32.f32 %v624
        %v627 = vcvt.s32.f32 %v625
        %v628 = vsel %vm292, %v621, 1.0
        %v629 = vsel %vm293, %v621, 1.0
        %632 = vrot.lane.b32.xlu0 %v628, 127
        %v633 = vpop.permute.xlu0 %632
        %634 = vrot.lane.b32.xlu0 %v629, 127
        %v635 = vpop.permute.xlu0 %634
        %v638 = vmul.f32 %v626, %v633
        %v639 = vmul.f32 %v627, %v635
        %641 = vset.pattern.permute.xlu0 32
        %642 = vperm.xlu0 %641, %v638
        %v643 = vpop.permute.xlu0 %642
        %646 = vset.pattern.permute.xlu0 32
        %647 = vperm.xlu0 %646, %v639
        %v648 = vpop.permute.xlu0 %647
        %v650 = vmul.f32 %v643, %v621
        %v651 = vmul.f32 %v648, %v621
        %v652 = vadd.f32 %v616, %v650
        %v653 = vadd.f32 %v617, %v651
        %v654 = vlaneseq
        %v655 = vshrl.u32 %v654, 7
        %v656 = vsub.s32 2, %v655
        %v657 = vrot.slane %v288, %v656
        %vm658 = vcmp.eq.f32.partialorder %v287, %v657
        %vm659 = vcmp.eq.f32.partialorder %v288, %v657
        %v660 = vsel %vm658, 1, 0
        %v661 = vsel %vm659, 1, 0
        %v662 = vcvt.s32.f32 %v660
        %v663 = vcvt.s32.f32 %v661
        %v664 = vsel %vm292, %v657, 1.0
        %v665 = vsel %vm293, %v657, 1.0
        %668 = vrot.lane.b32.xlu0 %v664, 127
        %v669 = vpop.permute.xlu0 %668
        %670 = vrot.lane.b32.xlu0 %v665, 127
        %v671 = vpop.permute.xlu0 %670
        %v674 = vmul.f32 %v662, %v669
        %v675 = vmul.f32 %v663, %v671
        %677 = vset.pattern.permute.xlu0 32
        %678 = vperm.xlu0 %677, %v674
        %v679 = vpop.permute.xlu0 %678
        %682 = vset.pattern.permute.xlu0 32
        %683 = vperm.xlu0 %682, %v675
        %v684 = vpop.permute.xlu0 %683
        %v686 = vmul.f32 %v679, %v657
        %v687 = vmul.f32 %v684, %v657
        %v688 = vadd.f32 %v652, %v686
        %v689 = vadd.f32 %v653, %v687
        %v690 = vlaneseq
        %v691 = vshrl.u32 %v690, 7
        %v692 = vsub.s32 3, %v691
        %v693 = vrot.slane %v288, %v692
        %vm694 = vcmp.eq.f32.partialorder %v287, %v693
        %vm695 = vcmp.eq.f32.partialorder %v288, %v693
        %v696 = vsel %vm694, 1, 0
        %v697 = vsel %vm695, 1, 0
        %v698 = vcvt.s32.f32 %v696
        %v699 = vcvt.s32.f32 %v697
        %v700 = vsel %vm292, %v693, 1.0
        %v701 = vsel %vm293, %v693, 1.0
        %704 = vrot.lane.b32.xlu0 %v700, 127
        %v705 = vpop.permute.xlu0 %704
        %706 = vrot.lane.b32.xlu0 %v701, 127
        %v707 = vpop.permute.xlu0 %706
        %v710 = vmul.f32 %v698, %v705
        %v711 = vmul.f32 %v699, %v707
        %713 = vset.pattern.permute.xlu0 32
        %714 = vperm.xlu0 %713, %v710
        %v715 = vpop.permute.xlu0 %714
        %718 = vset.pattern.permute.xlu0 32
        %719 = vperm.xlu0 %718, %v711
        %v720 = vpop.permute.xlu0 %719
        %v722 = vmul.f32 %v715, %v693
        %v723 = vmul.f32 %v720, %v693
        %v724 = vadd.f32 %v688, %v722
        %v725 = vadd.f32 %v689, %v723
        %v726 = vmul.f32 %v724, 0.083333336
        %v727 = vmul.f32 %v725, 0.083333336
        %v728 = vpack.c.bf16 %v727, %v726
        %v729 = vld [vmem:[#allocation7] sm:$0xf]
        %v730 = vld [vmem:[#allocation7 + $0x4] sm:$0xf]
        %v731 = vld [vmem:[#allocation7 + $0x8] sm:$0xf]
        %v732 = vld [vmem:[#allocation7 + $0xc] sm:$0xf]
        %v737 = vunpack.c.l.b16 %v729
        %v738 = vunpack.c.l.b16 %v730
        %v739 = vunpack.c.l.b16 %v731
        %v740 = vunpack.c.l.b16 %v732
        %v741 = vpack.c.b16 %v738, %v737
        %v742 = vpack.c.b16 %v740, %v739
        %vm745 = vcmask 261120
        %v747 = vsel %vm745, %v728, 0
        %749 = vmatprep.subr.bf16.mxu0 0
        %750 = vmatpush1.bf16.msra.mxu0 %v741
        %751 = vmatprep.subr.bf16.mxu0 0
        %752 = vmatpush1.bf16.msra.mxu0 %v742
        %753 = vmatprep.subr.bf16.mxu0 0
        %754 = vmatpush1.bf16.msra.mxu0 0
        %755 = vmatprep.subr.bf16.mxu0 0
        %756 = vmatpush1.bf16.msra.mxu0 0
        %757 = vmatprep.subr.bf16.mxu0 0
        %758 = vmatpush1.bf16.msra.mxu0 0
        %759 = vmatprep.subr.bf16.mxu0 0
        %760 = vmatpush1.bf16.msra.mxu0 0
        %761 = vmatprep.subr.bf16.mxu0 0
        %762 = vmatpush1.bf16.msra.mxu0 0
        %763 = vmatprep.subr.bf16.mxu0 0
        %764 = vmatpush1.bf16.msra.mxu0 0
        %765 = vmatprep.subr.bf16.mxu0 0
        %766 = vmatpush1.bf16.msra.mxu0 0
        %767 = vmatprep.subr.bf16.mxu0 0
        %768 = vmatpush1.bf16.msra.mxu0 0
        %769 = vmatprep.subr.bf16.mxu0 0
        %770 = vmatpush1.bf16.msra.mxu0 0
        %771 = vmatprep.subr.bf16.mxu0 0
        %772 = vmatpush1.bf16.msra.mxu0 0
        %773 = vmatprep.subr.bf16.mxu0 0
        %774 = vmatpush1.bf16.msra.mxu0 0
        %775 = vmatprep.subr.bf16.mxu0 0
        %776 = vmatpush1.bf16.msra.mxu0 0
        %777 = vmatprep.subr.bf16.mxu0 0
        %778 = vmatpush1.bf16.msra.mxu0 0
        %779 = vmatprep.subr.bf16.mxu0 0
        %780 = vmatpush1.bf16.msra.mxu0 0
        %781 = vmatprep.mubr.bf16.mxu0 0
        %782 = vmatmul.mubr.bf16.gmra.mrb[0].mxu0 %v747
        %v783 = vpop.f32.mrb[0].mxu0
        %v784 = vadd.f32 0.0, %v783
        %v785 = vpop.f32.mrb[0].mxu0
        %v786 = vpop.f32.mrb[0].mxu0
        %v787 = vadd.f32 0.0, %v786
        %v788 = vpop.f32.mrb[0].mxu0
        %789 = vdwg.mxu0
        %v790 = vld [vmem:[#allocation5] sm:$0xf]
        %v791 = vlaneseq
        %v792 = vshrl.u32 %v791, 7
        %v793 = vsub.s32 2, %v792
        %v794 = vrot.slane %v790, %v793
        %v795 = vmul.f32 %v784, %v794
        %v796 = vmul.f32 %v787, %v794
        %v797 = vsel %vm745, %v795, 0.0
        %798 = vadd.xlane.f32.xlu0 %v797
        %v799 = vpop.xlane.xlu0 %798
        %v800 = vsel %vm745, %v796, 0.0
        %801 = vadd.xlane.f32.xlu0 %v800
        %v802 = vpop.xlane.xlu0 %801
        %v803 = vsub.f32 %v784, %v799
        %v804 = vsub.f32 %v787, %v802
        %v805 = vlaneseq
        %v806 = vshrl.u32 %v805, 7
        %v807 = vsub.s32 3, %v806
        %v808 = vrot.slane %v790, %v807
        %v809 = vmul.f32 %v808, %v803
        %v810 = vmul.f32 %v808, %v804
        %v811 = vmul.f32 %v809, %v803
        %v812 = vmul.f32 %v810, %v804
        %v813 = vsel %vm745, %v811, 0.0
        %814 = vadd.xlane.f32.xlu0 %v813
        %v815 = vpop.xlane.xlu0 %814
        %v816 = vsel %vm745, %v812, 0.0
        %817 = vadd.xlane.f32.xlu0 %v816
        %v818 = vpop.xlane.xlu0 %817
        %v819 = vadd.f32 %v815, 1e-05
        %v820 = vadd.f32 %v818, 1e-05
        %v821 = vrsqrt.pop %v819
        %v822 = vrsqrt.pop %v820
        %v823 = vmul.f32 %v803, %v821
        %v824 = vmul.f32 %v804, %v822
        %v825 = vlaneseq
        %v826 = vshrl.u32 %v825, 7
        %v827 = vsub.s32 0, %v826
        %v828 = vrot.slane %v790, %v827
        %v829 = vmul.f32 %v828, %v823
        %v830 = vmul.f32 %v828, %v824
        %v831 = vlaneseq
        %v832 = vshrl.u32 %v831, 7
        %v833 = vsub.s32 1, %v832
        %v834 = vrot.slane %v790, %v833
        %v835 = vmul.f32 %v834, %v784
        %v836 = vmul.f32 %v834, %v787
        %v837 = vadd.f32 %v829, %v835
        %v838 = vadd.f32 %v830, %v836
        %v839 = vpack.c.bf16 %v838, %v837
        %v840 = vld [vmem:[#allocation8] sm:$0xf]
        %v841 = vld [vmem:[#allocation8 + $0x4] sm:$0xf]
        %v842 = vld [vmem:[#allocation8 + $0x8] sm:$0xf]
        %v843 = vld [vmem:[#allocation8 + $0xc] sm:$0xf]
        %v848 = vunpack.c.l.b16 %v840
        %v849 = vunpack.c.l.b16 %v841
        %v850 = vunpack.c.l.b16 %v842
        %v851 = vunpack.c.l.b16 %v843
        %v852 = vpack.c.b16 %v849, %v848
        %v853 = vpack.c.b16 %v851, %v850
        %v857 = vsel %vm745, %v839, 0
        %859 = vmatprep.subr.bf16.mxu0 0
        %860 = vmatpush1.bf16.msra.mxu0 %v852
        %861 = vmatprep.subr.bf16.mxu0 0
        %862 = vmatpush1.bf16.msra.mxu0 %v853
        %863 = vmatprep.subr.bf16.mxu0 0
        %864 = vmatpush1.bf16.msra.mxu0 0
        %865 = vmatprep.subr.bf16.mxu0 0
        %866 = vmatpush1.bf16.msra.mxu0 0
        %867 = vmatprep.subr.bf16.mxu0 0
        %868 = vmatpush1.bf16.msra.mxu0 0
        %869 = vmatprep.subr.bf16.mxu0 0
        %870 = vmatpush1.bf16.msra.mxu0 0
        %871 = vmatprep.subr.bf16.mxu0 0
        %872 = vmatpush1.bf16.msra.mxu0 0
        %873 = vmatprep.subr.bf16.mxu0 0
        %874 = vmatpush1.bf16.msra.mxu0 0
        %875 = vmatprep.subr.bf16.mxu0 0
        %876 = vmatpush1.bf16.msra.mxu0 0
        %877 = vmatprep.subr.bf16.mxu0 0
        %878 = vmatpush1.bf16.msra.mxu0 0
        %879 = vmatprep.subr.bf16.mxu0 0
        %880 = vmatpush1.bf16.msra.mxu0 0
        %881 = vmatprep.subr.bf16.mxu0 0
        %882 = vmatpush1.bf16.msra.mxu0 0
        %883 = vmatprep.subr.bf16.mxu0 0
        %884 = vmatpush1.bf16.msra.mxu0 0
        %885 = vmatprep.subr.bf16.mxu0 0
        %886 = vmatpush1.bf16.msra.mxu0 0
        %887 = vmatprep.subr.bf16.mxu0 0
        %888 = vmatpush1.bf16.msra.mxu0 0
        %889 = vmatprep.subr.bf16.mxu0 0
        %890 = vmatpush1.bf16.msra.mxu0 0
        %891 = vmatprep.mubr.bf16.mxu0 0
        %892 = vmatmul.mubr.bf16.gmra.mrb[0].mxu0 %v857
        %v893 = vpop.f32.mrb[0].mxu0
        %v894 = vadd.f32 0.0, %v893
        %v895 = vpop.f32.mrb[0].mxu0
        %v896 = vpop.f32.mrb[0].mxu0
        %v897 = vadd.f32 0.0, %v896
        %v898 = vpop.f32.mrb[0].mxu0
        %899 = vdwg.mxu0
        %v900 = vld [vmem:[%s4] sm:$0xf]
        %v901 = vlaneseq
        %v902 = vshrl.u32 %v901, 7
        %v903 = vsub.s32 0, %v902
        %v904 = vrot.slane %v900, %v903
        %v905 = vmul.f32 %v287, %v904
        %v906 = vmul.f32 %v288, %v904
        %v907 = vlaneseq
        %v908 = vshrl.u32 %v907, 7
        %v909 = vsub.s32 2, %v908
        %v910 = vrot.slane %v900, %v909
        %v911 = vmul.f32 %v894, %v910
        %v912 = vmul.f32 %v897, %v910
        %v913 = vadd.f32 %v905, %v911
        %v914 = vadd.f32 %v906, %v912
        %v915 = vsel %vm745, %v913, 0.0
        %916 = vadd.xlane.f32.xlu0 %v915
        %v917 = vpop.xlane.xlu0 %916
        %v918 = vsel %vm745, %v914, 0.0
        %919 = vadd.xlane.f32.xlu0 %v918
        %v920 = vpop.xlane.xlu0 %919
        %v921 = vadd.f32 %v917, %v287
        %v922 = vadd.f32 %v920, %v288
        %v923 = vlaneseq
        %v924 = vshrl.u32 %v923, 7
        %v925 = vsub.s32 1, %v924
        %v926 = vrot.slane %v900, %v925
        %v927 = vmul.f32 %v287, %v926
        %v928 = vmul.f32 %v288, %v926
        %v929 = vlaneseq
        %v930 = vshrl.u32 %v929, 7
        %v931 = vsub.s32 3, %v930
        %v932 = vrot.slane %v900, %v931
        %v933 = vmul.f32 %v894, %v932
        %v934 = vmul.f32 %v897, %v932
        %v935 = vadd.f32 %v927, %v933
        %v936 = vadd.f32 %v928, %v934
        %v937 = vsel %vm745, %v935, 0.0
        %938 = vadd.xlane.f32.xlu0 %v937
        %v939 = vpop.xlane.xlu0 %938
        %v940 = vsel %vm745, %v936, 0.0
        %941 = vadd.xlane.f32.xlu0 %v940
        %v942 = vpop.xlane.xlu0 %941
        %v943 = vadd.f32 %v939, %v287
        %v944 = vadd.f32 %v942, %v288
        %v945 = vxor.u32 %v921, 2147483648
        %v946 = vxor.u32 %v922, 2147483648
        %v947 = vmul.f32 %v945, 1.442695
        %v948 = vpow.pop %v947
        %v949 = vmul.f32 %v946, 1.442695
        %v950 = vpow.pop %v949
        %v951 = vadd.f32 %v948, 1.0
        %v952 = vadd.f32 %v950, 1.0
        %v953 = vrcp.pop %v951
        %v954 = vmul.f32 1.0, %v953
        %v955 = vrcp.pop %v952
        %v956 = vmul.f32 1.0, %v955
        %958 = vset.pattern.permute.xlu0 34
        %959 = vperm.xlu0 %958, %v954
        %v960 = vpop.permute.xlu0 %959
        %963 = vset.pattern.permute.xlu0 34
        %964 = vperm.xlu0 %963, %v956
        %v965 = vpop.permute.xlu0 %964
        %v967 = vmul.f32 %v960, %v287
        %v968 = vmul.f32 %v965, %v288
        %v969 = vxor.u32 %v943, 2147483648
        %v970 = vxor.u32 %v944, 2147483648
        %v971 = vmul.f32 %v969, 1.442695
        %v972 = vpow.pop %v971
        %v973 = vmul.f32 %v970, 1.442695
        %v974 = vpow.pop %v973
        %v975 = vadd.f32 %v972, 1.0
        %v976 = vadd.f32 %v974, 1.0
        %v977 = vrcp.pop %v975
        %v978 = vmul.f32 1.0, %v977
        %v979 = vrcp.pop %v976
        %v980 = vmul.f32 1.0, %v979
        %982 = vset.pattern.permute.xlu0 35
        %983 = vperm.xlu0 %982, %v978
        %v984 = vpop.permute.xlu0 %983
        %987 = vset.pattern.permute.xlu0 35
        %988 = vperm.xlu0 %987, %v980
        %v989 = vpop.permute.xlu0 %988
        %v991 = vmul.f32 %v984, %v894
        %v992 = vmul.f32 %v989, %v897
        %v993 = vadd.f32 %v967, %v991
        %v994 = vadd.f32 %v968, %v992
        %v995 = vsel %vm292, 1, 0
        %v996 = vsel %vm293, 1, 0
        %vm997 = vcmp.eq.s32.totalorder %v995, 1
        %vm998 = vcmp.eq.s32.totalorder %v996, 1
        %v999 = vsel %vm997, %v726, %v993
        %v1000 = vsel %vm998, %v727, %v994
        %1001 = vst.msk [vmem:[%s284] sm:$0xff] %vm745, %v999
        %1002 = vst.msk [vmem:[%s284 + $0x8] sm:$0xff] %vm745, %v1000
        %s1003 = sand.u32 %s142, 1
        %s1004 = scalar_lea.sflag [#allocation4], %s1003
        %s1005 = sand.u32 %s142, 1
        %s1006 = smul.addr %s1005, 16
        %s1007 = scalar_lea.vmem [#allocation10], %s1006
        // Predicated region
        $region57: #{tpu_custom_call.1} parent=39 // pred_check
          %p1008 = pneg %p152
        $region58: #{tpu_custom_call.1} parent=39 // pred_check_branch
          %1010 = sbr.rel (%p1008) target = $region60
        $region59: #{tpu_custom_call.1} parent=39 // pred_region
          %s1011 = smul.u32 2, %s24
          %s1013 = ssub.s32 256, 256
          %1014 = vsyncadd %s1004, %s1013
          %s1015 = smul.addr %s1011, 128
          %s1016 = scalar_lea.hbm %s5, %s1015
          %s1017 = sshll.u32 %s1007, 4
          %s1018 = int_to_ptr.vmem [resolvable:$true] %s1017
          %1023 = dma.vmem_to_hbm [thread:$0]  %s1018, 256, %s1016, %s1004, 128, 128, 8
        $region60: #{tpu_custom_call.1} parent=39 // pred_fallthru
          _
      $region40: #{tpu_custom_call.1} parent=5 // pred_fallthru
        _
      %p1024 = scmp.le.s32.totalorder 2, %s19
      // Predicated region
      $region61: #{tpu_custom_call.1} parent=5 // pred_check
        %p1025 = pneg %p1024
      $region62: #{tpu_custom_call.1} parent=5 // pred_check_branch
        %1027 = sbr.rel (%p1025) target = $region64
      $region63: #{tpu_custom_call.1} parent=5 // pred_region
        %s1028 = ssub.s32 %s19, 2
        // Predicated region
        $region65: #{tpu_custom_call.1} parent=63 // pred_check
          %p1029 = pneg %p158
        $region66: #{tpu_custom_call.1} parent=63 // pred_check_branch
          %1031 = sbr.rel (%p1029) target = $region68
        $region67: #{tpu_custom_call.1} parent=63 // pred_region
          %s1032 = sand.u32 %s143, 1
          %s1033 = scalar_lea.sflag [#allocation4], %s1032
          %s1034 = sand.u32 %s143, 1
          %s1035 = smul.addr %s1034, 16
          %s1036 = scalar_lea.vmem [#allocation10], %s1035
          %1037 = dma.done %s1033, 256
        $region68: #{tpu_custom_call.1} parent=63 // pred_fallthru
          _
      $region64: #{tpu_custom_call.1} parent=5 // pred_fallthru
        _
    $region6: #{tpu_custom_call.1} parent=1 // loop_footer
      %s23 = sadd.s32 1, %s19
    $region7: #{tpu_custom_call.1} parent=1 // loop_footer_branch
      %18 = sbr.rel target = $region3
    $region8: #{tpu_custom_call.1} parent=1 // loop_exit
      _
    %1038 = vsyncpa [#allocation3], 1
    %s1039 = scalar_lea.sflag [#allocation3], 1
    %1040 = vsyncpa %s1039, 1
    %1041 = vsyncpa [#allocation6], 1
    %1042 = vsyncpa [#allocation9], 1
    %1043 = vsyncpa [#allocation4], 1
    %s1044 = scalar_lea.sflag [#allocation4], 1
    %1045 = vsyncpa %s1044, 1

</llo_original>
